<compile_context>
chip_gen: v5e
topology: v5e:2x2
jax: 0.10.0
libtpu: 0.0.40
codegen_flags: <defaults>
</compile_context>

<pallas_src>
import functools
import math

import jax
import jax.numpy as jnp
from jax.experimental import pallas as pl
from jax.experimental.pallas import tpu as pltpu


def _round_up(x, m):
    return (x + m - 1) // m * m


# --------------------------- Pallas kernels ---------------------------------

def gcn_agg_kernel(a_ref, z_ref, dis_ref, s_ref, t_ref, out_ref, acc_ref, *,
                   fold_next_colscale):
    """(row, K)-tiled   out = relu( (D^-1/2 * (A @ z)) * s + t ) [ * D^-1/2 ].

    a_ref  : (tm, tk)   int8  raw 0/1 adjacency tile (with self loops)
    z_ref  : (Np, H)    bf16  right operand, resident in VMEM (fetched once)
    dis_ref: (tm, 1)    f32   D^-1/2 of this tile's rows
    s_ref  : (1, H)     f32   folded BN(eval) scale
    t_ref  : (1, H)     f32   folded BN(eval) shift (+ conv bias)
    acc_ref: (tm, H)    f32   scratch accumulator carried over the K grid axis
    """
    k = pl.program_id(1)
    tk = a_ref.shape[1]

    @pl.when(k == 0)
    def _():
        acc_ref[...] = jnp.zeros_like(acc_ref)

    # int8 -> bf16 upcast is VPU work hidden under the DMA/MXU slack; A
    # streams from HBM at 1 byte/elem.
    a = a_ref[...].astype(jnp.bfloat16)
    off = pl.multiple_of(k * tk, 128)
    acc_ref[...] += jnp.dot(a, z_ref[pl.ds(off, tk), :],
                            preferred_element_type=jnp.float32)

    @pl.when(k == pl.num_programs(1) - 1)
    def _():
        dis = dis_ref[...]
        h = jnp.maximum(acc_ref[...] * dis * s_ref[...] + t_ref[...], 0.0)
        # F.dropout(training=False) == identity.
        if fold_next_colscale:
            # Fold the next layer's column scale (D^-1/2) into the activations.
            h = h * dis
        out_ref[...] = h.astype(out_ref.dtype)


def gcn_head_kernel(pool_ref, h2_ref, wl_ref, bl_ref, out_ref):
    """global_mean_pool -> Linear -> log_softmax (tiny, single VMEM block)."""
    pooled = jnp.dot(pool_ref[...], h2_ref[...],           # bf16 x bf16 -> f32
                     preferred_element_type=jnp.float32)
    logits = jnp.dot(pooled, wl_ref[...],
                     preferred_element_type=jnp.float32) + bl_ref[...]
    m = jnp.max(logits, axis=1, keepdims=True)
    z = logits - m
    lse = jnp.log(jnp.sum(jnp.exp(z), axis=1, keepdims=True))
    out_ref[...] = z - lse


# ----------------------------- layer launcher --------------------------------

def _gcn_layer(a, z, dis, s, t, *, tm, tk, np_, h, fold_next_colscale):
    """One GCN aggregation layer:  relu(BN(D^-1/2 A z)) [* D^-1/2]."""
    grid = (np_ // tm, np_ // tk)

    # VMEM budget from the actual tile footprint (+ headroom), clipped to
    # v7x's 64 MiB physical VMEM.
    vmem_bytes = (2 * tm * tk                 # A double buffer (int8)
                  + 2 * np_ * h * 2           # resident z (count 2 bufs, safe)
                  + 2 * tm * h * 2            # out double buffer (bf16)
                  + tm * h * 4                # f32 accumulator scratch
                  + 2 * tm * 4 + 4 * h * 4    # dis / scale / shift
                  + (2 << 20))                # headroom
    vmem_bytes = int(max(16 << 20, min(vmem_bytes, 64 << 20)))

    cost = pl.CostEstimate(
        flops=2 * np_ * np_ * h,
        transcendentals=0,
        bytes_accessed=int(np_ * np_                 # A (int8)
                           + 2 * np_ * h * 2         # z in + out (bf16)
                           + np_ * 4 + 2 * h * 4))

    kernel = functools.partial(gcn_agg_kernel,
                               fold_next_colscale=fold_next_colscale)
    # TODO(synk): if a profile shows exposed DMA on the A tiles, bump the A
    #             BlockSpec to pipeline_mode=pl.Buffered(3).
    return pl.pallas_call(
        kernel,
        out_shape=jax.ShapeDtypeStruct((np_, h), jnp.bfloat16),
        grid=grid,
        in_specs=[
            pl.BlockSpec((tm, tk), lambda i, k: (i, k)),    # A tile (int8)
            pl.BlockSpec((np_, h), lambda i, k: (0, 0)),    # z resident (bf16)
            pl.BlockSpec((tm, 1), lambda i, k: (i, 0)),     # D^-1/2 rows
            pl.BlockSpec((1, h), lambda i, k: (0, 0)),      # BN scale
            pl.BlockSpec((1, h), lambda i, k: (0, 0)),      # BN shift
        ],
        out_specs=pl.BlockSpec((tm, h), lambda i, k: (i, 0)),
        scratch_shapes=[pltpu.VMEM((tm, h), jnp.float32)],
        compiler_params=pltpu.CompilerParams(
            dimension_semantics=("parallel", "arbitrary"),
            vmem_limit_bytes=vmem_bytes),
        cost_estimate=cost,
    )(a, z, dis, s, t)


# ------------------------------ wrapper --------------------------------------

@functools.partial(jax.jit, static_argnames=("num_graphs", "row_tile", "k_tile"))
def gcn_forward(x, edge_index, batch, params, *, num_graphs,
                row_tile=256, k_tile=2048):
    n, _ = x.shape
    hid1 = params["w1"].shape[1]        # 64
    hid2 = params["w2"].shape[1]        # 32
    c = params["w_lin"].shape[1]
    H1P = _round_up(hid1, 128)          # 128 (lane-dense)
    H2P = _round_up(hid2, 128)          # 128

    # Row tile multiple of 32 (int8 sublane tiling), K tile multiple of 128.
    tm = max(32, (int(row_tile) // 32) * 32)
    tk = max(128, (int(k_tile) // 128) * 128)
    np_ = _round_up(n, math.lcm(tm, tk))

    # --- glue: raw 0/1 adjacency with self loops, built directly in int8 ---
    src = edge_index[0].astype(jnp.int32)
    dst = edge_index[1].astype(jnp.int32)
    a = jnp.zeros((np_, np_), jnp.int8)
    a = a.at[dst, src].set(1)
    diag = jnp.arange(n)
    a = a.at[diag, diag].set(1)                          # add self loops

    # Degrees / D^-1/2 from edge_index: O(E) instead of an O(N^2) reduction.
    # (Assumes no duplicate edges / explicit self loops, matching the dense A.)
    deg = jnp.zeros((np_,), jnp.float32).at[dst].add(1.0)
    deg = deg.at[:n].add(1.0)                            # self loops
    dis = jax.lax.rsqrt(jnp.maximum(deg, 1.0))[:, None]  # (Np, 1) f32

    # --- glue: mean-pool matrix (G, Np) in bf16; padded nodes get weight 0 ---
    batch_p = jnp.full((np_,), -1, jnp.int32).at[:n].set(batch.astype(jnp.int32))
    onehot = (batch_p[None, :] == jnp.arange(num_graphs)[:, None]).astype(jnp.float32)
    counts = jnp.maximum(jnp.sum(onehot, axis=1, keepdims=True), 1.0)
    pool = (onehot / counts).astype(jnp.bfloat16)

    # --- glue: fold BN (eval) + conv bias into scale/shift; pad to 128 lanes ---
    eps = 1e-5
    s1 = params["bn1_gamma"] * jax.lax.rsqrt(params["bn1_var"] + eps)
    t1 = params["bn1_beta"] + (params["b1"] - params["bn1_mean"]) * s1
    s2 = params["bn2_gamma"] * jax.lax.rsqrt(params["bn2_var"] + eps)
    t2 = params["bn2_beta"] + (params["b2"] - params["bn2_mean"]) * s2

    def pad_row(v, w):
        return jnp.pad(v, (0, w - v.shape[0]))[None, :].astype(jnp.float32)

    s1p, t1p = pad_row(s1, H1P), pad_row(t1, H1P)
    s2p, t2p = pad_row(s2, H2P), pad_row(t2, H2P)

    w1p = jnp.pad(params["w1"], ((0, 0), (0, H1P - hid1)))                  # (F,128)
    w2p = jnp.pad(params["w2"],
                  ((0, H1P - hid1), (0, H2P - hid2))).astype(jnp.bfloat16)  # (128,128)
    wlp = jnp.pad(params["w_lin"], ((0, H2P - hid2), (0, 0)))               # (128,C)
    blp = params["b_lin"][None, :]

    # --- glue: tiny pre-projection z1 = D^-1/2 (x @ W1), bf16 for the MXU ---
    x_p = jnp.pad(x, ((0, np_ - n), (0, 0)))
    z1 = ((x_p @ w1p) * dis).astype(jnp.bfloat16)                           # (Np,128)

    # ---- layer 1: h1s = D^-1/2 * relu(bn1(A_hat (x W1) + b1)) ----
    h1s = _gcn_layer(a, z1, dis, s1p, t1p, tm=tm, tk=tk, np_=np_, h=H1P,
                     fold_next_colscale=True)

    # ---- hoist W2 via associativity: z2 = (D^-1/2 h1) @ W2 (tiny XLA matmul)
    z2 = jnp.dot(h1s, w2p,
                 preferred_element_type=jnp.float32).astype(jnp.bfloat16)   # (Np,128)

    # ---- layer 2: h2 = relu(bn2(A_hat (h1 W2) + b2)) ----
    h2 = _gcn_layer(a, z2, dis, s2p, t2p, tm=tm, tk=tk, np_=np_, h=H2P,
                    fold_next_colscale=False)

    # ---- head: global_mean_pool -> Linear -> log_softmax (tiny, single block)
    vmem = pl.BlockSpec(memory_space=pltpu.MemorySpace.VMEM)
    return pl.pallas_call(
        gcn_head_kernel,
        out_shape=jax.ShapeDtypeStruct((num_graphs, c), jnp.float32),
        in_specs=[vmem] * 4,
        out_specs=vmem,
    )(pool, h2, wlp, blp)


# ------------------------ pure-JAX reference (f32) ---------------------------

def gcn_reference(x, edge_index, batch, params, *, num_graphs):
    n = x.shape[0]
    src, dst = edge_index[0], edge_index[1]
    a = jnp.zeros((n, n), jnp.float32).at[dst, src].set(1.0)
    diag = jnp.arange(n)
    a = a.at[diag, diag].set(1.0)
    d_inv_sqrt = 1.0 / jnp.sqrt(jnp.sum(a, axis=1))
    a_hat = a * d_inv_sqrt[:, None] * d_inv_sqrt[None, :]
    eps = 1e-5
    s1 = params["bn1_gamma"] / jnp.sqrt(params["bn1_var"] + eps)
    t1 = params["bn1_beta"] - params["bn1_mean"] * s1
    s2 = params["bn2_gamma"] / jnp.sqrt(params["bn2_var"] + eps)
    t2 = params["bn2_beta"] - params["bn2_mean"] * s2
    h = a_hat @ (x @ params["w1"]) + params["b1"]
    h = jnp.maximum(h * s1 + t1, 0.0)
    h = a_hat @ (h @ params["w2"]) + params["b2"]
    h = jnp.maximum(h * s2 + t2, 0.0)
    onehot = (batch[None, :] == jnp.arange(num_graphs)[:, None]).astype(jnp.float32)
    pooled = (onehot @ h) / jnp.maximum(onehot.sum(1, keepdims=True), 1.0)
    logits = pooled @ params["w_lin"] + params["b_lin"]
    return jax.nn.log_softmax(logits, axis=1)


def init_params(key, num_node_features, num_classes):
    ks = jax.random.split(key, 8)
    hid1, hid2 = 64, 32

    def glorot(k, fan_in, fan_out):
        lim = jnp.sqrt(6.0 / (fan_in + fan_out))
        return jax.random.uniform(k, (fan_in, fan_out), jnp.float32, -lim, lim)

    return {
        "w1": glorot(ks[0], num_node_features, hid1),
        "b1": jnp.zeros((hid1,), jnp.float32),
        "bn1_gamma": 1.0 + 0.1 * jax.random.normal(ks[1], (hid1,), jnp.float32),
        "bn1_beta": 0.1 * jax.random.normal(ks[2], (hid1,), jnp.float32),
        "bn1_mean": 0.05 * jax.random.normal(ks[3], (hid1,), jnp.float32),
        "bn1_var": 1.0 + 0.1 * jnp.abs(jax.random.normal(ks[4], (hid1,), jnp.float32)),
        "w2": glorot(ks[5], hid1, hid2),
        "b2": jnp.zeros((hid2,), jnp.float32),
        "bn2_gamma": jnp.ones((hid2,), jnp.float32),
        "bn2_beta": jnp.zeros((hid2,), jnp.float32),
        "bn2_mean": jnp.zeros((hid2,), jnp.float32),
        "bn2_var": jnp.ones((hid2,), jnp.float32),
        "w_lin": glorot(ks[6], hid2, num_classes),
        "b_lin": 0.01 * jax.random.normal(ks[7], (num_classes,), jnp.float32),
    }


def _run_case(x, edge_index, batch, params, num_graphs, row_tile, k_tile):
    out = gcn_forward(x, edge_index, batch, params, num_graphs=num_graphs,
                      row_tile=row_tile, k_tile=k_tile)
    out = jax.block_until_ready(out)
    assert out.shape == (num_graphs, params["w_lin"].shape[1])
    assert bool(jnp.all(jnp.isfinite(out)))
    ref = jax.block_until_ready(
        gcn_reference(x, edge_index, batch, params, num_graphs=num_graphs))
    max_err = float(jnp.max(jnp.abs(out - ref)))
    assert max_err < 0.1, f"max |out - ref| = {max_err}"


if __name__ == "__main__":
    key = jax.random.PRNGKey(0)
    num_node_features = 8
    num_classes = 4
    k_x1, k_x2, k_p = jax.random.split(key, 3)
    params = init_params(k_p, num_node_features, num_classes)

    # ---- case 1: tiny ring graph (16 nodes, 2 graphs) ----
    n1 = 16
    x1 = jax.random.normal(k_x1, (n1, num_node_features), jnp.float32)
    s = jnp.arange(n1, dtype=jnp.int32)
    d = (s + 1) % n1
    edge_index1 = jnp.stack(
        [jnp.concatenate([s, d]), jnp.concatenate([d, s])], axis=0)
    batch1 = jnp.concatenate([jnp.zeros((8,), jnp.int32), jnp.ones((8,), jnp.int32)])
    _run_case(x1, edge_index1, batch1, params, num_graphs=2,
              row_tile=64, k_tile=128)

    # ---- case 2: 300 nodes / 3 graphs; exercises a (6, 3) row x K grid with
    #      multi-step accumulation and the megacore-parallel row axis ----
    n2, g_size = 300, 100
    x2 = jax.random.normal(k_x2, (n2, num_node_features), jnp.float32)
    base = jnp.arange(n2, dtype=jnp.int32)
    block = (base // g_size) * g_size
    srcs, dsts = [], []
    for off in (1, 7):                      # per-graph multi-ring, no duplicates
        nbr = (base + off) % g_size + block
        srcs += [base, nbr]
        dsts += [nbr, base]
    edge_index2 = jnp.stack(
        [jnp.concatenate(srcs), jnp.concatenate(dsts)], axis=0)
    batch2 = jnp.repeat(jnp.arange(3, dtype=jnp.int32), g_size)
    _run_case(x2, edge_index2, batch2, params, num_graphs=3,
              row_tile=64, k_tile=128)

    print("KERNEL_OK")
</pallas_src>

<mosaic_0001>
module attributes {stable_mosaic.version = 11 : i64} {
  func.func @gcn_agg_kernel(%arg0: i32, %arg1: i32, %arg2: memref<64x128xi8, #tpu.memory_space<vmem>>, %arg3: memref<128x128xbf16, #tpu.memory_space<vmem>>, %arg4: memref<64x1xf32, #tpu.memory_space<vmem>>, %arg5: memref<1x128xf32, #tpu.memory_space<vmem>>, %arg6: memref<1x128xf32, #tpu.memory_space<vmem>>, %arg7: memref<64x128xbf16, #tpu.memory_space<vmem>>, %arg8: memref<64x128xf32, #tpu.memory_space<vmem>>) attributes {dimension_semantics = [#tpu.dimension_semantics<parallel>, #tpu.dimension_semantics<arbitrary>], iteration_bounds = array<i64: 2, 1>, scalar_prefetch = 0 : i64, scratch_operands = 1 : i64, tpu.core_type = #tpu.core_type<tc>, window_params = [{transform_indices = @transform_0, window_bounds = array<i64: 64, 128>}, {pipeline_mode = #tpu.pipeline_mode<synchronous>, transform_indices = @transform_1, window_bounds = array<i64: 128, 128>}, {transform_indices = @transform_2, window_bounds = array<i64: 64, 1>}, {pipeline_mode = #tpu.pipeline_mode<synchronous>, transform_indices = @transform_3, window_bounds = array<i64: 1, 128>}, {pipeline_mode = #tpu.pipeline_mode<synchronous>, transform_indices = @transform_4, window_bounds = array<i64: 1, 128>}, {transform_indices = @transform_5, window_bounds = array<i64: 64, 128>}]} {
    %c0_i32 = arith.constant 0 : i32
    %0 = arith.cmpi eq, %arg1, %c0_i32 : i32
    %1 = arith.extui %0 : i1 to i32
    %c0_i32_0 = arith.constant 0 : i32
    %2 = arith.cmpi ne, %1, %c0_i32_0 : i32
    scf.if %2 {
      %cst_9 = arith.constant 0.000000e+00 : f32
      %16 = vector.broadcast %cst_9 : f32 to vector<64x128xf32>
      %c0_10 = arith.constant 0 : index
      %c0_11 = arith.constant 0 : index
      %17 = vector.load %arg8[%c0_10, %c0_11] : memref<64x128xf32, #tpu.memory_space<vmem>>, vector<64x128xf32>
      tpu.vector_store %arg8[%c0_10, %c0_11], %16 {strides = array<i32>} : memref<64x128xf32, #tpu.memory_space<vmem>>, vector<64x128xf32>,
    } else {
    }
    %c0 = arith.constant 0 : index
    %c0_1 = arith.constant 0 : index
    %3 = vector.load %arg2[%c0, %c0_1] : memref<64x128xi8, #tpu.memory_space<vmem>>, vector<64x128xi8>
    %4 = arith.sitofp %3 : vector<64x128xi8> to vector<64x128xbf16>
    %c128_i32 = arith.constant 128 : i32
    %5 = arith.muli %arg1, %c128_i32 : i32
    %6 = tpu.assume_multiple %5, 128 : i32
    %c0_2 = arith.constant 0 : index
    %c0_3 = arith.constant 0 : index
    %7 = vector.load %arg8[%c0_2, %c0_3] : memref<64x128xf32, #tpu.memory_space<vmem>>, vector<64x128xf32>
    %8 = arith.index_cast %6 : i32 to index
    %c0_4 = arith.constant 0 : index
    %9 = vector.load %arg3[%8, %c0_4] : memref<128x128xbf16, #tpu.memory_space<vmem>>, vector<128x128xbf16>
    %cst = arith.constant dense<0.000000e+00> : vector<64x128xf32>
    %10 = tpu.matmul %4, %9, %cst {dimension_numbers = #tpu.dot_dimension_numbers<[1], [0], [0], [1], [0, 0, 1, 1], [], []>} : vector<64x128xbf16>, vector<128x128xbf16>, vector<64x128xf32> -> vector<64x128xf32>
    %11 = arith.addf %7, %10 : vector<64x128xf32>
    %c0_5 = arith.constant 0 : index
    %c0_6 = arith.constant 0 : index
    %12 = vector.load %arg8[%c0_5, %c0_6] : memref<64x128xf32, #tpu.memory_space<vmem>>, vector<64x128xf32>
    tpu.vector_store %arg8[%c0_5, %c0_6], %11 {strides = array<i32>} : memref<64x128xf32, #tpu.memory_space<vmem>>, vector<64x128xf32>,
    %c0_i32_7 = arith.constant 0 : i32
    %13 = arith.cmpi eq, %arg1, %c0_i32_7 : i32
    %14 = arith.extui %13 : i1 to i32
    %c0_i32_8 = arith.constant 0 : i32
    %15 = arith.cmpi ne, %14, %c0_i32_8 : i32
    scf.if %15 {
      %c0_9 = arith.constant 0 : index
      %c0_10 = arith.constant 0 : index
      %16 = vector.load %arg4[%c0_9, %c0_10] : memref<64x1xf32, #tpu.memory_space<vmem>>, vector<64x1xf32>
      %c0_11 = arith.constant 0 : index
      %c0_12 = arith.constant 0 : index
      %17 = vector.load %arg8[%c0_11, %c0_12] : memref<64x128xf32, #tpu.memory_space<vmem>>, vector<64x128xf32>
      %18 = vector.broadcast %16 : vector<64x1xf32> to vector<64x128xf32>
      %19 = arith.mulf %17, %18 : vector<64x128xf32>
      %c0_13 = arith.constant 0 : index
      %c0_14 = arith.constant 0 : index
      %20 = vector.load %arg5[%c0_13, %c0_14] : memref<1x128xf32, #tpu.memory_space<vmem>>, vector<1x128xf32>
      %21 = vector.broadcast %20 : vector<1x128xf32> to vector<64x128xf32>
      %22 = arith.mulf %19, %21 : vector<64x128xf32>
      %c0_15 = arith.constant 0 : index
      %c0_16 = arith.constant 0 : index
      %23 = vector.load %arg6[%c0_15, %c0_16] : memref<1x128xf32, #tpu.memory_space<vmem>>, vector<1x128xf32>
      %24 = vector.broadcast %23 : vector<1x128xf32> to vector<64x128xf32>
      %25 = arith.addf %22, %24 : vector<64x128xf32>
      %cst_17 = arith.constant 0.000000e+00 : f32
      %26 = vector.broadcast %cst_17 : f32 to vector<64x128xf32>
      %27 = arith.maximumf %25, %26 : vector<64x128xf32>
      %28 = vector.broadcast %16 : vector<64x1xf32> to vector<64x128xf32>
      %29 = arith.mulf %27, %28 : vector<64x128xf32>
      %30 = arith.truncf %29 : vector<64x128xf32> to vector<64x128xbf16>
      %c0_18 = arith.constant 0 : index
      %c0_19 = arith.constant 0 : index
      %31 = vector.load %arg7[%c0_18, %c0_19] : memref<64x128xbf16, #tpu.memory_space<vmem>>, vector<64x128xbf16>
      tpu.vector_store %arg7[%c0_18, %c0_19], %30 {strides = array<i32>} : memref<64x128xbf16, #tpu.memory_space<vmem>>, vector<64x128xbf16>,
    } else {
    }
    return
  }
  func.func @transform_0(%arg0: i32, %arg1: i32) -> (i32, i32) {
    %c0_i32 = arith.constant 0 : i32
    return %arg0, %arg1 : i32, i32
  }
  func.func @transform_1(%arg0: i32, %arg1: i32) -> (i32, i32) {
    %c0_i32 = arith.constant 0 : i32
    %c0_i32_0 = arith.constant 0 : i32
    %c0_i32_1 = arith.constant 0 : i32
    return %c0_i32, %c0_i32_0 : i32, i32
  }
  func.func @transform_2(%arg0: i32, %arg1: i32) -> (i32, i32) {
    %c0_i32 = arith.constant 0 : i32
    %c0_i32_0 = arith.constant 0 : i32
    return %arg0, %c0_i32 : i32, i32
  }
  func.func @transform_3(%arg0: i32, %arg1: i32) -> (i32, i32) {
    %c0_i32 = arith.constant 0 : i32
    %c0_i32_0 = arith.constant 0 : i32
    %c0_i32_1 = arith.constant 0 : i32
    return %c0_i32, %c0_i32_0 : i32, i32
  }
  func.func @transform_4(%arg0: i32, %arg1: i32) -> (i32, i32) {
    %c0_i32 = arith.constant 0 : i32
    %c0_i32_0 = arith.constant 0 : i32
    %c0_i32_1 = arith.constant 0 : i32
    return %c0_i32, %c0_i32_0 : i32, i32
  }
  func.func @transform_5(%arg0: i32, %arg1: i32) -> (i32, i32) {
    %c0_i32 = arith.constant 0 : i32
    %c0_i32_0 = arith.constant 0 : i32
    return %arg0, %c0_i32 : i32, i32
  }
}

module attributes {stable_mosaic.version = 11 : i64} {
  func.func @gcn_agg_kernel(%arg0: i32, %arg1: i32, %arg2: memref<64x128xi8, #tpu.memory_space<vmem>>, %arg3: memref<128x128xbf16, #tpu.memory_space<vmem>>, %arg4: memref<64x1xf32, #tpu.memory_space<vmem>>, %arg5: memref<1x128xf32, #tpu.memory_space<vmem>>, %arg6: memref<1x128xf32, #tpu.memory_space<vmem>>, %arg7: memref<64x128xbf16, #tpu.memory_space<vmem>>, %arg8: memref<64x128xf32, #tpu.memory_space<vmem>>) attributes {dimension_semantics = [#tpu.dimension_semantics<parallel>, #tpu.dimension_semantics<arbitrary>], iteration_bounds = array<i64: 2, 1>, scalar_prefetch = 0 : i64, scratch_operands = 1 : i64, tpu.core_type = #tpu.core_type<tc>, window_params = [{transform_indices = @transform_0, window_bounds = array<i64: 64, 128>}, {pipeline_mode = #tpu.pipeline_mode<synchronous>, transform_indices = @transform_1, window_bounds = array<i64: 128, 128>}, {transform_indices = @transform_2, window_bounds = array<i64: 64, 1>}, {pipeline_mode = #tpu.pipeline_mode<synchronous>, transform_indices = @transform_3, window_bounds = array<i64: 1, 128>}, {pipeline_mode = #tpu.pipeline_mode<synchronous>, transform_indices = @transform_4, window_bounds = array<i64: 1, 128>}, {transform_indices = @transform_5, window_bounds = array<i64: 64, 128>}]} {
    %c0_i32 = arith.constant 0 : i32
    %0 = arith.cmpi eq, %arg1, %c0_i32 : i32
    %1 = arith.extui %0 : i1 to i32
    %c0_i32_0 = arith.constant 0 : i32
    %2 = arith.cmpi ne, %1, %c0_i32_0 : i32
    scf.if %2 {
      %cst_9 = arith.constant 0.000000e+00 : f32
      %16 = vector.broadcast %cst_9 : f32 to vector<64x128xf32>
      %c0_10 = arith.constant 0 : index
      %c0_11 = arith.constant 0 : index
      %17 = vector.load %arg8[%c0_10, %c0_11] : memref<64x128xf32, #tpu.memory_space<vmem>>, vector<64x128xf32>
      tpu.vector_store %arg8[%c0_10, %c0_11], %16 {strides = array<i32>} : memref<64x128xf32, #tpu.memory_space<vmem>>, vector<64x128xf32>,
    } else {
    }
    %c0 = arith.constant 0 : index
    %c0_1 = arith.constant 0 : index
    %3 = vector.load %arg2[%c0, %c0_1] : memref<64x128xi8, #tpu.memory_space<vmem>>, vector<64x128xi8>
    %4 = arith.sitofp %3 : vector<64x128xi8> to vector<64x128xbf16>
    %c128_i32 = arith.constant 128 : i32
    %5 = arith.muli %arg1, %c128_i32 : i32
    %6 = tpu.assume_multiple %5, 128 : i32
    %c0_2 = arith.constant 0 : index
    %c0_3 = arith.constant 0 : index
    %7 = vector.load %arg8[%c0_2, %c0_3] : memref<64x128xf32, #tpu.memory_space<vmem>>, vector<64x128xf32>
    %8 = arith.index_cast %6 : i32 to index
    %c0_4 = arith.constant 0 : index
    %9 = vector.load %arg3[%8, %c0_4] : memref<128x128xbf16, #tpu.memory_space<vmem>>, vector<128x128xbf16>
    %cst = arith.constant dense<0.000000e+00> : vector<64x128xf32>
    %10 = tpu.matmul %4, %9, %cst {dimension_numbers = #tpu.dot_dimension_numbers<[1], [0], [0], [1], [0, 0, 1, 1], [], []>} : vector<64x128xbf16>, vector<128x128xbf16>, vector<64x128xf32> -> vector<64x128xf32>
    %11 = arith.addf %7, %10 : vector<64x128xf32>
    %c0_5 = arith.constant 0 : index
    %c0_6 = arith.constant 0 : index
    %12 = vector.load %arg8[%c0_5, %c0_6] : memref<64x128xf32, #tpu.memory_space<vmem>>, vector<64x128xf32>
    tpu.vector_store %arg8[%c0_5, %c0_6], %11 {strides = array<i32>} : memref<64x128xf32, #tpu.memory_space<vmem>>, vector<64x128xf32>,
    %c0_i32_7 = arith.constant 0 : i32
    %13 = arith.cmpi eq, %arg1, %c0_i32_7 : i32
    %14 = arith.extui %13 : i1 to i32
    %c0_i32_8 = arith.constant 0 : i32
    %15 = arith.cmpi ne, %14, %c0_i32_8 : i32
    scf.if %15 {
      %c0_9 = arith.constant 0 : index
      %c0_10 = arith.constant 0 : index
      %16 = vector.load %arg4[%c0_9, %c0_10] : memref<64x1xf32, #tpu.memory_space<vmem>>, vector<64x1xf32>
      %c0_11 = arith.constant 0 : index
      %c0_12 = arith.constant 0 : index
      %17 = vector.load %arg8[%c0_11, %c0_12] : memref<64x128xf32, #tpu.memory_space<vmem>>, vector<64x128xf32>
      %18 = vector.broadcast %16 : vector<64x1xf32> to vector<64x128xf32>
      %19 = arith.mulf %17, %18 : vector<64x128xf32>
      %c0_13 = arith.constant 0 : index
      %c0_14 = arith.constant 0 : index
      %20 = vector.load %arg5[%c0_13, %c0_14] : memref<1x128xf32, #tpu.memory_space<vmem>>, vector<1x128xf32>
      %21 = vector.broadcast %20 : vector<1x128xf32> to vector<64x128xf32>
      %22 = arith.mulf %19, %21 : vector<64x128xf32>
      %c0_15 = arith.constant 0 : index
      %c0_16 = arith.constant 0 : index
      %23 = vector.load %arg6[%c0_15, %c0_16] : memref<1x128xf32, #tpu.memory_space<vmem>>, vector<1x128xf32>
      %24 = vector.broadcast %23 : vector<1x128xf32> to vector<64x128xf32>
      %25 = arith.addf %22, %24 : vector<64x128xf32>
      %cst_17 = arith.constant 0.000000e+00 : f32
      %26 = vector.broadcast %cst_17 : f32 to vector<64x128xf32>
      %27 = arith.maximumf %25, %26 : vector<64x128xf32>
      %28 = arith.truncf %27 : vector<64x128xf32> to vector<64x128xbf16>
      %c0_18 = arith.constant 0 : index
      %c0_19 = arith.constant 0 : index
      %29 = vector.load %arg7[%c0_18, %c0_19] : memref<64x128xbf16, #tpu.memory_space<vmem>>, vector<64x128xbf16>
      tpu.vector_store %arg7[%c0_18, %c0_19], %28 {strides = array<i32>} : memref<64x128xbf16, #tpu.memory_space<vmem>>, vector<64x128xbf16>,
    } else {
    }
    return
  }
  func.func @transform_0(%arg0: i32, %arg1: i32) -> (i32, i32) {
    %c0_i32 = arith.constant 0 : i32
    return %arg0, %arg1 : i32, i32
  }
  func.func @transform_1(%arg0: i32, %arg1: i32) -> (i32, i32) {
    %c0_i32 = arith.constant 0 : i32
    %c0_i32_0 = arith.constant 0 : i32
    %c0_i32_1 = arith.constant 0 : i32
    return %c0_i32, %c0_i32_0 : i32, i32
  }
  func.func @transform_2(%arg0: i32, %arg1: i32) -> (i32, i32) {
    %c0_i32 = arith.constant 0 : i32
    %c0_i32_0 = arith.constant 0 : i32
    return %arg0, %c0_i32 : i32, i32
  }
  func.func @transform_3(%arg0: i32, %arg1: i32) -> (i32, i32) {
    %c0_i32 = arith.constant 0 : i32
    %c0_i32_0 = arith.constant 0 : i32
    %c0_i32_1 = arith.constant 0 : i32
    return %c0_i32, %c0_i32_0 : i32, i32
  }
  func.func @transform_4(%arg0: i32, %arg1: i32) -> (i32, i32) {
    %c0_i32 = arith.constant 0 : i32
    %c0_i32_0 = arith.constant 0 : i32
    %c0_i32_1 = arith.constant 0 : i32
    return %c0_i32, %c0_i32_0 : i32, i32
  }
  func.func @transform_5(%arg0: i32, %arg1: i32) -> (i32, i32) {
    %c0_i32 = arith.constant 0 : i32
    %c0_i32_0 = arith.constant 0 : i32
    return %arg0, %c0_i32 : i32, i32
  }
}

module attributes {stable_mosaic.version = 11 : i64} {
  func.func @gcn_head_kernel(%arg0: memref<2x128xbf16, #tpu.memory_space<vmem>>, %arg1: memref<128x128xbf16, #tpu.memory_space<vmem>>, %arg2: memref<128x4xf32, #tpu.memory_space<vmem>>, %arg3: memref<1x4xf32, #tpu.memory_space<vmem>>, %arg4: memref<2x4xf32, #tpu.memory_space<vmem>>) attributes {dimension_semantics = [], scalar_prefetch = 0 : i64, scratch_operands = 0 : i64, tpu.core_type = #tpu.core_type<tc>} {
    %c0 = arith.constant 0 : index
    %c0_0 = arith.constant 0 : index
    %0 = vector.load %arg0[%c0, %c0_0] : memref<2x128xbf16, #tpu.memory_space<vmem>>, vector<2x128xbf16>
    %c0_1 = arith.constant 0 : index
    %c0_2 = arith.constant 0 : index
    %1 = vector.load %arg1[%c0_1, %c0_2] : memref<128x128xbf16, #tpu.memory_space<vmem>>, vector<128x128xbf16>
    %cst = arith.constant dense<0.000000e+00> : vector<2x128xf32>
    %2 = tpu.matmul %0, %1, %cst {dimension_numbers = #tpu.dot_dimension_numbers<[1], [0], [0], [1], [0, 0, 1, 1], [], []>} : vector<2x128xbf16>, vector<128x128xbf16>, vector<2x128xf32> -> vector<2x128xf32>
    %c0_3 = arith.constant 0 : index
    %c0_4 = arith.constant 0 : index
    %3 = vector.load %arg2[%c0_3, %c0_4] : memref<128x4xf32, #tpu.memory_space<vmem>>, vector<128x4xf32>
    %cst_5 = arith.constant dense<0.000000e+00> : vector<2x4xf32>
    %4 = tpu.matmul %2, %3, %cst_5 {dimension_numbers = #tpu.dot_dimension_numbers<[1], [0], [0], [1], [0, 0, 1, 1], [], []>} : vector<2x128xf32>, vector<128x4xf32>, vector<2x4xf32> -> vector<2x4xf32>
    %c0_6 = arith.constant 0 : index
    %c0_7 = arith.constant 0 : index
    %5 = vector.load %arg3[%c0_6, %c0_7] : memref<1x4xf32, #tpu.memory_space<vmem>>, vector<1x4xf32>
    %6 = vector.broadcast %5 : vector<1x4xf32> to vector<2x4xf32>
    %7 = arith.addf %4, %6 : vector<2x4xf32>
    %cst_8 = arith.constant dense<0xFF800000> : vector<2xf32>
    %8 = vector.multi_reduction <maximumf>, %7, %cst_8 [1] : vector<2x4xf32> to vector<2xf32>
    %9 = vector.shape_cast %8 : vector<2xf32> to vector<2x1xf32>
    %10 = vector.broadcast %9 : vector<2x1xf32> to vector<2x4xf32>
    %11 = arith.subf %7, %10 : vector<2x4xf32>
    %12 = math.exp %11 : vector<2x4xf32>
    %cst_9 = arith.constant dense<0.000000e+00> : vector<2xf32>
    %13 = vector.multi_reduction <add>, %12, %cst_9 [1] : vector<2x4xf32> to vector<2xf32>
    %14 = vector.shape_cast %13 : vector<2xf32> to vector<2x1xf32>
    %15 = math.log %14 : vector<2x1xf32>
    %16 = vector.broadcast %15 : vector<2x1xf32> to vector<2x4xf32>
    %17 = arith.subf %11, %16 : vector<2x4xf32>
    %c0_10 = arith.constant 0 : index
    %c0_11 = arith.constant 0 : index
    %18 = vector.load %arg4[%c0_10, %c0_11] : memref<2x4xf32, #tpu.memory_space<vmem>>, vector<2x4xf32>
    tpu.vector_store %arg4[%c0_10, %c0_11], %17 {strides = array<i32>} : memref<2x4xf32, #tpu.memory_space<vmem>>, vector<2x4xf32>,
    return
  }
}

</mosaic_0001>

<llo_original>
// kernel: gcn_forward.3
$region0: #{gcn_forward.3}
  #allocation0 [shape = 'u32[]', space=smem, size = 0x4, offset = 0x4, fixed_abs, tag = 'smem constant byte address 0x4 - core index']
  #allocation1 [shape = 'u32[72,128]{1,0:T(1,128)}', space=vmem, size = 0x9000, scoped, tag = 'internal scratch']
  #allocation2 [shape = 'f32[64,128]{1,0:T(8,128)}', space=vmem, size = 0x8000, scoped, tag = 'scratch operand']
  %s0 = inlined_call_operand.vmem [shape: s8[128,128], index: 0, kind: input, shape index: {}]
  %s1 = inlined_call_operand.vmem [shape: bf16[128,128], index: 1, kind: input, shape index: {}]
  %s2 = inlined_call_operand.vmem [shape: f32[128,1], index: 2, kind: input, shape index: {}]
  %s3 = inlined_call_operand.vmem [shape: f32[1,128], index: 3, kind: input, shape index: {}]
  %s4 = inlined_call_operand.vmem [shape: f32[1,128], index: 4, kind: input, shape index: {}]
  %s5 = inlined_call_operand.vmem [shape: bf16[128,128], index: 5, kind: output, shape index: {}]
  %s6 = sld [smem:[#allocation0]]
  $region61: #{gcn_forward.3} parent=0
    _
  %s8 = ssub.s32 1, %s6
  %s9 = scalar_select 0, %s8, %s6
  loop: start=0, step=1, limit=4
  $region2: #{gcn_forward.3} parent=0 // loop_pre_header
    _
  $region3: #{gcn_forward.3} parent=0 // loop_header
    %s11 = sphi 0, %s15
    %p12 = scmp.ge.s32.totalorder %s11, 4
    %s18 = sphi 0, %s30
    %s19 = sphi 0, %s26
    %s20 = sphi 0, %s18
    %s21 = sphi 0, %s19
    %s22 = sphi 0, %s20
    %s23 = sphi 0, %s21
    %s35 = sphi 0, %s37
    %s38 = sphi 0, %s35
    %s39 = sphi 0, %s38
    %s55 = sphi 0, %s39
    %s59 = sphi 0, %s59
    %s61 = sphi 0, %s59
    %s62 = sphi 0, %s61
    %s76 = sphi 0, %s62
    %s82 = sphi 0, %s84
    %s85 = sphi 0, %s82
    %s86 = sphi 0, %s85
    %s102 = sphi 0, %s86
    %s106 = sphi 0, %s106
    %s108 = sphi 0, %s106
    %s109 = sphi 0, %s108
    %s123 = sphi 0, %s109
    %s127 = sphi 0, %s127
    %s129 = sphi 0, %s127
    %s130 = sphi 0, %s129
    %s144 = sphi 0, %s130
    %s150 = sphi 0, %s152
    %s153 = sphi 0, %s150
    %s154 = sphi 0, %s153
    %s170 = sphi 0, %s154
  $region4: #{gcn_forward.3} parent=0 // loop_header_branch
    %14 = sbr.rel (%p12) target = $region8
  $region5: #{gcn_forward.3} parent=0 // loop_body
    %s16 = ssub.s32 %s11, 1
    %s17 = ssub.s32 %s11, 2
    %s24 = sadd.s32 1, %s19
    %p25 = scmp.ge.s32.totalorder %s24, 1
    %s26 = scalar_select %p25, 0, %s24
    %s27 = sadd.s32 1, %s18
    %s28 = scalar_select %p25, %s27, %s18
    %p29 = scmp.ge.s32.totalorder %s28, 2
    %s30 = scalar_select %p29, 0, %s28
    %s31 = ssub.s32 %s18, %s30
    %s32 = ssub.s32 %s19, %s26
    %s33 = sor.u32 %s31, %s32
    %p34 = scmp.eq.s32.totalorder %s33, 0
    %s36 = sadd.s32 %s35, 1
    %s37 = scalar_select %p34, %s35, %s36
    %p40 = pneg %p34
    %p41 = scmp.eq.s32.totalorder %s11, 1
    %p42 = por %p40, %p41
    %p43 = scmp.ne.s32.totalorder %s35, %s38
    %p44 = scmp.eq.s32.totalorder %s11, 0
    %p45 = por %p43, %p44
    %p46 = scmp.ne.s32.totalorder %s35, %s38
    %p47 = scmp.eq.s32.totalorder %s16, 1
    %p48 = por %p46, %p47
    %p49 = scmp.ne.s32.totalorder %s38, %s39
    %p50 = scmp.eq.s32.totalorder %s16, 0
    %p51 = por %p49, %p50
    %p52 = scmp.ne.s32.totalorder %s38, %s39
    %p53 = scmp.eq.s32.totalorder %s17, 1
    %p54 = por %p52, %p53
    %p56 = scmp.ne.s32.totalorder %s39, %s55
    %p57 = scmp.eq.s32.totalorder %s17, 0
    %p58 = por %p56, %p57
    %s60 = sadd.s32 %s59, 1
    %p63 = scmp.eq.s32.totalorder %s11, 1
    %p64 = scmp.ne.s32.totalorder %s59, %s61
    %p65 = scmp.eq.s32.totalorder %s11, 0
    %p66 = por %p64, %p65
    %p67 = scmp.ne.s32.totalorder %s59, %s61
    %p68 = scmp.eq.s32.totalorder %s16, 1
    %p69 = por %p67, %p68
    %p70 = scmp.ne.s32.totalorder %s61, %s62
    %p71 = scmp.eq.s32.totalorder %s16, 0
    %p72 = por %p70, %p71
    %p73 = scmp.ne.s32.totalorder %s61, %s62
    %p74 = scmp.eq.s32.totalorder %s17, 1
    %p75 = por %p73, %p74
    %p77 = scmp.ne.s32.totalorder %s62, %s76
    %p78 = scmp.eq.s32.totalorder %s17, 0
    %p79 = por %p77, %p78
    %s80 = ssub.s32 %s18, %s30
    %p81 = scmp.eq.s32.totalorder %s80, 0
    %s83 = sadd.s32 %s82, 1
    %s84 = scalar_select %p81, %s82, %s83
    %p87 = pneg %p81
    %p88 = scmp.eq.s32.totalorder %s11, 1
    %p89 = por %p87, %p88
    %p90 = scmp.ne.s32.totalorder %s82, %s85
    %p91 = scmp.eq.s32.totalorder %s11, 0
    %p92 = por %p90, %p91
    %p93 = scmp.ne.s32.totalorder %s82, %s85
    %p94 = scmp.eq.s32.totalorder %s16, 1
    %p95 = por %p93, %p94
    %p96 = scmp.ne.s32.totalorder %s85, %s86
    %p97 = scmp.eq.s32.totalorder %s16, 0
    %p98 = por %p96, %p97
    %p99 = scmp.ne.s32.totalorder %s85, %s86
    %p100 = scmp.eq.s32.totalorder %s17, 1
    %p101 = por %p99, %p100
    %p103 = scmp.ne.s32.totalorder %s86, %s102
    %p104 = scmp.eq.s32.totalorder %s17, 0
    %p105 = por %p103, %p104
    %s107 = sadd.s32 %s106, 1
    %p110 = scmp.eq.s32.totalorder %s11, 1
    %p111 = scmp.ne.s32.totalorder %s106, %s108
    %p112 = scmp.eq.s32.totalorder %s11, 0
    %p113 = por %p111, %p112
    %p114 = scmp.ne.s32.totalorder %s106, %s108
    %p115 = scmp.eq.s32.totalorder %s16, 1
    %p116 = por %p114, %p115
    %p117 = scmp.ne.s32.totalorder %s108, %s109
    %p118 = scmp.eq.s32.totalorder %s16, 0
    %p119 = por %p117, %p118
    %p120 = scmp.ne.s32.totalorder %s108, %s109
    %p121 = scmp.eq.s32.totalorder %s17, 1
    %p122 = por %p120, %p121
    %p124 = scmp.ne.s32.totalorder %s109, %s123
    %p125 = scmp.eq.s32.totalorder %s17, 0
    %p126 = por %p124, %p125
    %s128 = sadd.s32 %s127, 1
    %p131 = scmp.eq.s32.totalorder %s11, 1
    %p132 = scmp.ne.s32.totalorder %s127, %s129
    %p133 = scmp.eq.s32.totalorder %s11, 0
    %p134 = por %p132, %p133
    %p135 = scmp.ne.s32.totalorder %s127, %s129
    %p136 = scmp.eq.s32.totalorder %s16, 1
    %p137 = por %p135, %p136
    %p138 = scmp.ne.s32.totalorder %s129, %s130
    %p139 = scmp.eq.s32.totalorder %s16, 0
    %p140 = por %p138, %p139
    %p141 = scmp.ne.s32.totalorder %s129, %s130
    %p142 = scmp.eq.s32.totalorder %s17, 1
    %p143 = por %p141, %p142
    %p145 = scmp.ne.s32.totalorder %s130, %s144
    %p146 = scmp.eq.s32.totalorder %s17, 0
    %p147 = por %p145, %p146
    %s148 = ssub.s32 %s18, %s30
    %p149 = scmp.eq.s32.totalorder %s148, 0
    %s151 = sadd.s32 %s150, 1
    %s152 = scalar_select %p149, %s150, %s151
    %p155 = pneg %p149
    %p156 = scmp.eq.s32.totalorder %s11, 1
    %p157 = por %p155, %p156
    %p158 = scmp.ne.s32.totalorder %s150, %s153
    %p159 = scmp.eq.s32.totalorder %s11, 0
    %p160 = por %p158, %p159
    %p161 = scmp.ne.s32.totalorder %s150, %s153
    %p162 = scmp.eq.s32.totalorder %s16, 1
    %p163 = por %p161, %p162
    %p164 = scmp.ne.s32.totalorder %s153, %s154
    %p165 = scmp.eq.s32.totalorder %s16, 0
    %p166 = por %p164, %p165
    %p167 = scmp.ne.s32.totalorder %s153, %s154
    %p168 = scmp.eq.s32.totalorder %s17, 1
    %p169 = por %p167, %p168
    %p171 = scmp.ne.s32.totalorder %s154, %s170
    %p172 = scmp.eq.s32.totalorder %s17, 0
    %p173 = por %p171, %p172
    %p174 = scmp.le.s32.totalorder 1, %s11
    %p175 = scmp.lt.s32.totalorder %s11, 3
    %p176 = pnand %p174, %p175
    %p177 = pneg %p176
    // Predicated region
    $region9: #{gcn_forward.3} parent=5 // pred_check
      _
    $region10: #{gcn_forward.3} parent=5 // pred_check_branch
      %179 = sbr.rel (%p176) target = $region12
    $region11: #{gcn_forward.3} parent=5 // pred_region
      %s180 = ssub.s32 %s11, 1
      // Predicated region
      $region13: #{gcn_forward.3} parent=11 // pred_check
        %p181 = pneg %p72
      $region14: #{gcn_forward.3} parent=11 // pred_check_branch
        %183 = sbr.rel (%p181) target = $region16
      $region15: #{gcn_forward.3} parent=11 // pred_region
        _
      $region16: #{gcn_forward.3} parent=11 // pred_fallthru
        _
      // Predicated region
      $region17: #{gcn_forward.3} parent=11 // pred_check
        %p184 = pneg %p119
      $region18: #{gcn_forward.3} parent=11 // pred_check_branch
        %186 = sbr.rel (%p184) target = $region20
      $region19: #{gcn_forward.3} parent=11 // pred_region
        _
      $region20: #{gcn_forward.3} parent=11 // pred_fallthru
        _
      // Predicated region
      $region21: #{gcn_forward.3} parent=11 // pred_check
        %p187 = pneg %p140
      $region22: #{gcn_forward.3} parent=11 // pred_check_branch
        %189 = sbr.rel (%p187) target = $region24
      $region23: #{gcn_forward.3} parent=11 // pred_region
        _
      $region24: #{gcn_forward.3} parent=11 // pred_fallthru
        _
    $region12: #{gcn_forward.3} parent=5 // pred_fallthru
      _
    %p190 = scmp.lt.s32.totalorder %s11, 2
    // Predicated region
    $region25: #{gcn_forward.3} parent=5 // pred_check
      %p191 = pneg %p190
    $region26: #{gcn_forward.3} parent=5 // pred_check_branch
      %193 = sbr.rel (%p191) target = $region28
    $region27: #{gcn_forward.3} parent=5 // pred_region
      // Predicated region
      $region29: #{gcn_forward.3} parent=27 // pred_check
        %p194 = pneg %p45
      $region30: #{gcn_forward.3} parent=27 // pred_check_branch
        %196 = sbr.rel (%p194) target = $region32
      $region31: #{gcn_forward.3} parent=27 // pred_region
        %s197 = smul.u32 8, %s18
        %p198 = scmp.lt.s32.totalorder %s197, 15
        %s199 = scalar_select %p198, %s197, 15
        %p200 = scmp.lt.s32.totalorder %s19, 0
        %s201 = scalar_select %p200, %s19, 0
        %s202 = sadd.s32 %s201, %s199
        %s203 = smul.addr %s202, 2
        %s204 = scalar_lea.vmem %s0, %s203
        %s205 = smul.u32 8, %s18
      $region32: #{gcn_forward.3} parent=27 // pred_fallthru
        _
      // Predicated region
      $region33: #{gcn_forward.3} parent=27 // pred_check
        %p206 = pneg %p92
      $region34: #{gcn_forward.3} parent=27 // pred_check_branch
        %208 = sbr.rel (%p206) target = $region36
      $region35: #{gcn_forward.3} parent=27 // pred_region
        %s209 = smul.u32 8, %s18
        %p210 = scmp.lt.s32.totalorder %s209, 15
        %s211 = scalar_select %p210, %s209, 15
        %s212 = smul.addr %s211, 8
        %s213 = scalar_lea.vmem %s2, %s212
        %s214 = smul.u32 8, %s18
      $region36: #{gcn_forward.3} parent=27 // pred_fallthru
        _
    $region28: #{gcn_forward.3} parent=5 // pred_fallthru
      _
    %p215 = scmp.le.s32.totalorder 1, %s11
    %p216 = scmp.lt.s32.totalorder %s11, 3
    %p217 = pnand %p215, %p216
    %p218 = pneg %p217
    // Predicated region
    $region37: #{gcn_forward.3} parent=5 // pred_check
      _
    $region38: #{gcn_forward.3} parent=5 // pred_check_branch
      %220 = sbr.rel (%p217) target = $region40
    $region39: #{gcn_forward.3} parent=5 // pred_region
      %s221 = ssub.s32 %s11, 1
      %s222 = smul.u32 8, %s20
      %p223 = scmp.lt.s32.totalorder %s222, 15
      %s224 = scalar_select %p223, %s222, 15
      %p225 = scmp.lt.s32.totalorder %s21, 0
      %s226 = scalar_select %p225, %s21, 0
      %s227 = sadd.s32 %s226, %s224
      %s228 = smul.addr %s227, 2
      %s229 = scalar_lea.vmem %s0, %s228
      %p230 = pneg %p51
      %p231 = pneg %p48
      %p232 = pneg %p72
      %p233 = pneg %p69
      %s234 = smul.u32 8, %s20
      %p235 = scmp.lt.s32.totalorder %s234, 15
      %s236 = scalar_select %p235, %s234, 15
      %s237 = smul.addr %s236, 8
      %s238 = scalar_lea.vmem %s2, %s237
      %p239 = pneg %p98
      %p240 = pneg %p95
      %p241 = pneg %p119
      %p242 = pneg %p116
      %p243 = pneg %p140
      %p244 = pneg %p137
      %p245 = pneg %p166
      %p246 = pneg %p163
      %s247 = smul.u32 8, %s20
      %p248 = scmp.lt.s32.totalorder %s247, 15
      %s249 = scalar_select %p248, %s247, 15
      %s250 = smul.addr %s249, 4
      %s251 = scalar_lea.vmem %s5, %s250
      %s252 = smul.u32 8, %s20
      %p253 = scmp.lt.s32.totalorder %s252, 15
      %s254 = scalar_select %p253, %s252, 15
      %p255 = scmp.lt.s32.totalorder %s21, 0
      %s256 = scalar_select %p255, %s21, 0
      %s257 = sadd.s32 %s256, %s254
      %s258 = smul.addr %s257, 2
      %s259 = scalar_lea.vmem %s0, %s258
      %s260 = smul.u32 8, %s20
      %s261 = smul.u32 8, %s20
      %p262 = scmp.lt.s32.totalorder %s261, 15
      %s263 = scalar_select %p262, %s261, 15
      %s264 = smul.addr %s263, 8
      %s265 = scalar_lea.vmem %s2, %s264
      %s266 = smul.u32 8, %s20
      %s267 = smul.u32 8, %s20
      %p268 = scmp.lt.s32.totalorder %s267, 15
      %s269 = scalar_select %p268, %s267, 15
      %s270 = smul.addr %s269, 4
      %s271 = scalar_lea.vmem %s5, %s270
      %s272 = smul.u32 8, %s20
      %p273 = scmp.eq.s32.totalorder %s21, 0
      // Predicated region
      $region41: #{gcn_forward.3} parent=39 // pred_check
        %p274 = pneg %p273
      $region42: #{gcn_forward.3} parent=39 // pred_check_branch
        %276 = sbr.rel (%p274) target = $region44
      $region43: #{gcn_forward.3} parent=39 // pred_region
        %277 = vst [vmem:[#allocation2] sm:$0xff] 0.0
        %278 = vst [vmem:[#allocation2 + $0x8] sm:$0xff] 0.0
        %279 = vst [vmem:[#allocation2 + $0x10] sm:$0xff] 0.0
        %280 = vst [vmem:[#allocation2 + $0x18] sm:$0xff] 0.0
        %281 = vst [vmem:[#allocation2 + $0x20] sm:$0xff] 0.0
        %282 = vst [vmem:[#allocation2 + $0x28] sm:$0xff] 0.0
        %283 = vst [vmem:[#allocation2 + $0x30] sm:$0xff] 0.0
        %284 = vst [vmem:[#allocation2 + $0x38] sm:$0xff] 0.0
      $region44: #{gcn_forward.3} parent=39 // pred_fallthru
        _
      %v285 = vld [vmem:[%s259] sm:$0x3]
      %v286 = vld [vmem:[%s259 + $0x2] sm:$0x3]
      %v287 = vld [vmem:[%s259 + $0x4] sm:$0x3]
      %v288 = vld [vmem:[%s259 + $0x6] sm:$0x3]
      %v289 = vld [vmem:[%s259 + $0x8] sm:$0x3]
      %v290 = vld [vmem:[%s259 + $0xa] sm:$0x3]
      %v291 = vld [vmem:[%s259 + $0xc] sm:$0x3]
      %v292 = vld [vmem:[%s259 + $0xe] sm:$0x3]
      %v293 = vunpack.c.0.s8 %v285
      %v294 = vunpack.c.0.s8 %v286
      %v295 = vunpack.c.0.s8 %v287
      %v296 = vunpack.c.0.s8 %v288
      %v297 = vunpack.c.0.s8 %v289
      %v298 = vunpack.c.0.s8 %v290
      %v299 = vunpack.c.0.s8 %v291
      %v300 = vunpack.c.0.s8 %v292
      %v301 = vcvt.s32.f32 %v293
      %v302 = vcvt.s32.f32 %v294
      %v303 = vcvt.s32.f32 %v295
      %v304 = vcvt.s32.f32 %v296
      %v305 = vcvt.s32.f32 %v297
      %v306 = vcvt.s32.f32 %v298
      %v307 = vcvt.s32.f32 %v299
      %v308 = vcvt.s32.f32 %v300
      %v309 = vpack.c.bf16 %v302, %v301
      %v310 = vpack.c.bf16 %v304, %v303
      %v311 = vpack.c.bf16 %v306, %v305
      %v312 = vpack.c.bf16 %v308, %v307
      %s313 = smul.u32 %s21, 128
      %v314 = vld [vmem:[#allocation2] sm:$0xff]
      %v315 = vld [vmem:[#allocation2 + $0x8] sm:$0xff]
      %v316 = vld [vmem:[#allocation2 + $0x10] sm:$0xff]
      %v317 = vld [vmem:[#allocation2 + $0x18] sm:$0xff]
      %v318 = vld [vmem:[#allocation2 + $0x20] sm:$0xff]
      %v319 = vld [vmem:[#allocation2 + $0x28] sm:$0xff]
      %v320 = vld [vmem:[#allocation2 + $0x30] sm:$0xff]
      %v321 = vld [vmem:[#allocation2 + $0x38] sm:$0xff]
      %s322 = sshra.s32 %s313, 3
      %s323 = sand.u32 %s313, 7
      %s324 = smul.addr %s322, 4
      %s325 = scalar_lea.vmem %s1, %s324
      %v326 = vld [vmem:[%s325] sm:$0xf]
      %v327 = vld [vmem:[%s325 + $0x4] sm:$0xf]
      %v328 = vld [vmem:[%s325 + $0x8] sm:$0xf]
      %v329 = vld [vmem:[%s325 + $0xc] sm:$0xf]
      %v330 = vld [vmem:[%s325 + $0x10] sm:$0xf]
      %v331 = vld [vmem:[%s325 + $0x14] sm:$0xf]
      %v332 = vld [vmem:[%s325 + $0x18] sm:$0xf]
      %v333 = vld [vmem:[%s325 + $0x1c] sm:$0xf]
      %v334 = vld [vmem:[%s325 + $0x20] sm:$0xf]
      %v335 = vld [vmem:[%s325 + $0x24] sm:$0xf]
      %v336 = vld [vmem:[%s325 + $0x28] sm:$0xf]
      %v337 = vld [vmem:[%s325 + $0x2c] sm:$0xf]
      %v338 = vld [vmem:[%s325 + $0x30] sm:$0xf]
      %v339 = vld [vmem:[%s325 + $0x34] sm:$0xf]
      %v340 = vld [vmem:[%s325 + $0x38] sm:$0xf]
      %v341 = vld [vmem:[%s325 + $0x3c] sm:$0xf]
      %v358 = vunpack.c.l.b16 %v326
      %v359 = vunpack.c.l.b16 %v327
      %v360 = vunpack.c.l.b16 %v328
      %v361 = vunpack.c.l.b16 %v329
      %v362 = vunpack.c.l.b16 %v330
      %v363 = vunpack.c.l.b16 %v331
      %v364 = vunpack.c.l.b16 %v332
      %v365 = vunpack.c.l.b16 %v333
      %v366 = vunpack.c.l.b16 %v334
      %v367 = vunpack.c.l.b16 %v335
      %v368 = vunpack.c.l.b16 %v336
      %v369 = vunpack.c.l.b16 %v337
      %v370 = vunpack.c.l.b16 %v338
      %v371 = vunpack.c.l.b16 %v339
      %v372 = vunpack.c.l.b16 %v340
      %v373 = vunpack.c.l.b16 %v341
      %v374 = vpack.c.b16 %v359, %v358
      %v375 = vpack.c.b16 %v361, %v360
      %v376 = vpack.c.b16 %v363, %v362
      %v377 = vpack.c.b16 %v365, %v364
      %v378 = vpack.c.b16 %v367, %v366
      %v379 = vpack.c.b16 %v369, %v368
      %v380 = vpack.c.b16 %v371, %v370
      %v381 = vpack.c.b16 %v373, %v372
      %390 = vmatpush.bf16.msra.mxu0 %v381
      %391 = vmatpush.bf16.msra.mxu0 %v380
      %392 = vmatpush.bf16.msra.mxu0 %v379
      %393 = vmatpush.bf16.msra.mxu0 %v378
      %394 = vmatpush.bf16.msra.mxu0 %v377
      %395 = vmatpush.bf16.msra.mxu0 %v376
      %396 = vmatpush.bf16.msra.mxu0 %v375
      %397 = vmatpush.bf16.msra.mxu0 %v374
      %398 = vmatmul.bf16.gmra.mxu0 %v309
      %v399 = vpop.f32.mrf.mxu0
      %v400 = vadd.f32 0.0, %v399
      %v401 = vpop.f32.mrf.mxu0
      %v402 = vadd.f32 0.0, %v401
      %403 = vmatmul.bf16.gmra.mxu0 %v310
      %v404 = vpop.f32.mrf.mxu0
      %v405 = vadd.f32 0.0, %v404
      %v406 = vpop.f32.mrf.mxu0
      %v407 = vadd.f32 0.0, %v406
      %408 = vmatmul.bf16.gmra.mxu0 %v311
      %v409 = vpop.f32.mrf.mxu0
      %v410 = vadd.f32 0.0, %v409
      %v411 = vpop.f32.mrf.mxu0
      %v412 = vadd.f32 0.0, %v411
      %413 = vmatmul.bf16.gmra.mxu0 %v312
      %v414 = vpop.f32.mrf.mxu0
      %v415 = vadd.f32 0.0, %v414
      %v416 = vpop.f32.mrf.mxu0
      %v417 = vadd.f32 0.0, %v416
      %418 = vdwg.mxu0
      %v419 = vadd.f32 %v314, %v400
      %v420 = vadd.f32 %v315, %v402
      %v421 = vadd.f32 %v316, %v405
      %v422 = vadd.f32 %v317, %v407
      %v423 = vadd.f32 %v318, %v410
      %v424 = vadd.f32 %v319, %v412
      %v425 = vadd.f32 %v320, %v415
      %v426 = vadd.f32 %v321, %v417
      %427 = vst [vmem:[#allocation2] sm:$0xff] %v419
      %428 = vst [vmem:[#allocation2 + $0x8] sm:$0xff] %v420
      %429 = vst [vmem:[#allocation2 + $0x10] sm:$0xff] %v421
      %430 = vst [vmem:[#allocation2 + $0x18] sm:$0xff] %v422
      %431 = vst [vmem:[#allocation2 + $0x20] sm:$0xff] %v423
      %432 = vst [vmem:[#allocation2 + $0x28] sm:$0xff] %v424
      %433 = vst [vmem:[#allocation2 + $0x30] sm:$0xff] %v425
      %434 = vst [vmem:[#allocation2 + $0x38] sm:$0xff] %v426
      // Predicated region
      $region45: #{gcn_forward.3} parent=39 // pred_check
        %p435 = pneg %p273
      $region46: #{gcn_forward.3} parent=39 // pred_check_branch
        %437 = sbr.rel (%p435) target = $region48
      $region47: #{gcn_forward.3} parent=39 // pred_region
        %v438 = vld [vmem:[%s265] sm:$0xff]
        %v439 = vld [vmem:[%s265 + $0x8] sm:$0xff]
        %v440 = vld [vmem:[%s265 + $0x10] sm:$0xff]
        %v441 = vld [vmem:[%s265 + $0x18] sm:$0xff]
        %v442 = vld [vmem:[%s265 + $0x20] sm:$0xff]
        %v443 = vld [vmem:[%s265 + $0x28] sm:$0xff]
        %v444 = vld [vmem:[%s265 + $0x30] sm:$0xff]
        %v445 = vld [vmem:[%s265 + $0x38] sm:$0xff]
        %v446 = vld [vmem:[#allocation2] sm:$0xff]
        %v447 = vld [vmem:[#allocation2 + $0x8] sm:$0xff]
        %v448 = vld [vmem:[#allocation2 + $0x10] sm:$0xff]
        %v449 = vld [vmem:[#allocation2 + $0x18] sm:$0xff]
        %v450 = vld [vmem:[#allocation2 + $0x20] sm:$0xff]
        %v451 = vld [vmem:[#allocation2 + $0x28] sm:$0xff]
        %v452 = vld [vmem:[#allocation2 + $0x30] sm:$0xff]
        %v453 = vld [vmem:[#allocation2 + $0x38] sm:$0xff]
        %455 = vset.pattern.permute.xlu0 0
        %456 = vperm.xlu0 %455, %v438
        %v457 = vpop.permute.xlu0 %456
        %460 = vset.pattern.permute.xlu0 0
        %461 = vperm.xlu0 %460, %v439
        %v462 = vpop.permute.xlu0 %461
        %465 = vset.pattern.permute.xlu0 0
        %466 = vperm.xlu0 %465, %v440
        %v467 = vpop.permute.xlu0 %466
        %470 = vset.pattern.permute.xlu0 0
        %471 = vperm.xlu0 %470, %v441
        %v472 = vpop.permute.xlu0 %471
        %475 = vset.pattern.permute.xlu0 0
        %476 = vperm.xlu0 %475, %v442
        %v477 = vpop.permute.xlu0 %476
        %480 = vset.pattern.permute.xlu0 0
        %481 = vperm.xlu0 %480, %v443
        %v482 = vpop.permute.xlu0 %481
        %485 = vset.pattern.permute.xlu0 0
        %486 = vperm.xlu0 %485, %v444
        %v487 = vpop.permute.xlu0 %486
        %490 = vset.pattern.permute.xlu0 0
        %491 = vperm.xlu0 %490, %v445
        %v492 = vpop.permute.xlu0 %491
        %v494 = vmul.f32 %v446, %v457
        %v495 = vmul.f32 %v447, %v462
        %v496 = vmul.f32 %v448, %v467
        %v497 = vmul.f32 %v449, %v472
        %v498 = vmul.f32 %v450, %v477
        %v499 = vmul.f32 %v451, %v482
        %v500 = vmul.f32 %v452, %v487
        %v501 = vmul.f32 %v453, %v492
        %v502 = vld [vmem:[%s3] sm:$0x1]
        %v504 = vperm.slane %v502, 0
        %v506 = vmul.f32 %v494, %v504
        %v507 = vmul.f32 %v495, %v504
        %v508 = vmul.f32 %v496, %v504
        %v509 = vmul.f32 %v497, %v504
        %v510 = vmul.f32 %v498, %v504
        %v511 = vmul.f32 %v499, %v504
        %v512 = vmul.f32 %v500, %v504
        %v513 = vmul.f32 %v501, %v504
        %v514 = vld [vmem:[%s4] sm:$0x1]
        %v516 = vperm.slane %v514, 0
        %v518 = vadd.f32 %v506, %v516
        %v519 = vadd.f32 %v507, %v516
        %v520 = vadd.f32 %v508, %v516
        %v521 = vadd.f32 %v509, %v516
        %v522 = vadd.f32 %v510, %v516
        %v523 = vadd.f32 %v511, %v516
        %v524 = vadd.f32 %v512, %v516
        %v525 = vadd.f32 %v513, %v516
        %v526 = vmax.f32 %v518, 0.0
        %v527 = vmax.f32 %v519, 0.0
        %v528 = vmax.f32 %v520, 0.0
        %v529 = vmax.f32 %v521, 0.0
        %v530 = vmax.f32 %v522, 0.0
        %v531 = vmax.f32 %v523, 0.0
        %v532 = vmax.f32 %v524, 0.0
        %v533 = vmax.f32 %v525, 0.0
        %v534 = vmul.f32 %v526, %v457
        %v535 = vmul.f32 %v527, %v462
        %v536 = vmul.f32 %v528, %v467
        %v537 = vmul.f32 %v529, %v472
        %v538 = vmul.f32 %v530, %v477
        %v539 = vmul.f32 %v531, %v482
        %v540 = vmul.f32 %v532, %v487
        %v541 = vmul.f32 %v533, %v492
        %v542 = vpack.c.bf16 %v534, %v534
        %v543 = vpack.c.bf16 %v535, %v535
        %v544 = vpack.c.bf16 %v536, %v536
        %v545 = vpack.c.bf16 %v537, %v537
        %v546 = vpack.c.bf16 %v538, %v538
        %v547 = vpack.c.bf16 %v539, %v539
        %v548 = vpack.c.bf16 %v540, %v540
        %v549 = vpack.c.bf16 %v541, %v541
        %550 = vst [vmem:[%s271] sm:$0xf] %v542
        %551 = vst [vmem:[%s271 + $0x4] sm:$0xf] %v543
        %552 = vst [vmem:[%s271 + $0x8] sm:$0xf] %v544
        %553 = vst [vmem:[%s271 + $0xc] sm:$0xf] %v545
        %554 = vst [vmem:[%s271 + $0x10] sm:$0xf] %v546
        %555 = vst [vmem:[%s271 + $0x14] sm:$0xf] %v547
        %556 = vst [vmem:[%s271 + $0x18] sm:$0xf] %v548
        %557 = vst [vmem:[%s271 + $0x1c] sm:$0xf] %v549
      $region48: #{gcn_forward.3} parent=39 // pred_fallthru
        _
      %s558 = smul.u32 8, %s20
      %p559 = scmp.lt.s32.totalorder %s558, 15
      %s560 = scalar_select %p559, %s558, 15
      %s561 = smul.addr %s560, 4
      %s562 = scalar_lea.vmem %s5, %s561
      // Predicated region
      $region49: #{gcn_forward.3} parent=39 // pred_check
        %p563 = pneg %p163
      $region50: #{gcn_forward.3} parent=39 // pred_check_branch
        %565 = sbr.rel (%p563) target = $region52
      $region51: #{gcn_forward.3} parent=39 // pred_region
        %s566 = smul.u32 8, %s20
      $region52: #{gcn_forward.3} parent=39 // pred_fallthru
        _
    $region40: #{gcn_forward.3} parent=5 // pred_fallthru
      _
    %p567 = scmp.le.s32.totalorder 2, %s11
    // Predicated region
    $region53: #{gcn_forward.3} parent=5 // pred_check
      %p568 = pneg %p567
    $region54: #{gcn_forward.3} parent=5 // pred_check_branch
      %570 = sbr.rel (%p568) target = $region56
    $region55: #{gcn_forward.3} parent=5 // pred_region
      %s571 = ssub.s32 %s11, 2
      // Predicated region
      $region57: #{gcn_forward.3} parent=55 // pred_check
        %p572 = pneg %p169
      $region58: #{gcn_forward.3} parent=55 // pred_check_branch
        %574 = sbr.rel (%p572) target = $region60
      $region59: #{gcn_forward.3} parent=55 // pred_region
        %s575 = smul.u32 8, %s22
        %p576 = scmp.lt.s32.totalorder %s575, 15
        %s577 = scalar_select %p576, %s575, 15
        %s578 = smul.addr %s577, 4
        %s579 = scalar_lea.vmem %s5, %s578
      $region60: #{gcn_forward.3} parent=55 // pred_fallthru
        _
    $region56: #{gcn_forward.3} parent=5 // pred_fallthru
      _
  $region6: #{gcn_forward.3} parent=0 // loop_footer
    %s15 = sadd.s32 1, %s11
  $region7: #{gcn_forward.3} parent=0 // loop_footer_branch
    %10 = sbr.rel target = $region3
  $region8: #{gcn_forward.3} parent=0 // loop_exit
    _

// kernel: gcn_forward.5
$region0: #{gcn_forward.5}
  #allocation0 [shape = 'u32[]', space=smem, size = 0x4, offset = 0x4, fixed_abs, tag = 'smem constant byte address 0x4 - core index']
  #allocation1 [shape = 'u32[72,128]{1,0:T(1,128)}', space=vmem, size = 0x9000, scoped, tag = 'internal scratch']
  %s0 = inlined_call_operand.vmem [shape: bf16[2,128], index: 0, kind: input, shape index: {}]
  %s1 = inlined_call_operand.vmem [shape: bf16[128,128], index: 1, kind: input, shape index: {}]
  %s2 = inlined_call_operand.vmem [shape: f32[128,4], index: 2, kind: input, shape index: {}]
  %s3 = inlined_call_operand.vmem [shape: f32[1,4], index: 3, kind: input, shape index: {}]
  %s4 = inlined_call_operand.hbm [shape: f32[2,4], index: 4, kind: output, shape index: {}]
  %s5 = sld [smem:[#allocation0]]
  $region26: #{gcn_forward.5} parent=0
    _
  %s7 = ssub.s32 1, %s5
  %s8 = scalar_select 0, %s7, %s5
  $region1: #{gcn_forward.5} parent=0
    #allocation2 [shape = 'u8[1024]{0}', space=vmem, size = 0x400, scoped, tag = 'output window, operand 0, single buffered']
    #allocation3 [shape = 's32[1]{0}', space=sflag, size = 0x4, scoped, tag = 'scoped memory for gcn_forward.5']
    %9 = vsyncpa [#allocation3], 0
    // Predicated region
    $region2: #{gcn_forward.5} parent=1 // pred_check
      _
    $region3: #{gcn_forward.5} parent=1 // pred_check_branch
      %11 = sbr.rel (0) target = $region5
    $region4: #{gcn_forward.5} parent=1 // pred_region
      _
    $region5: #{gcn_forward.5} parent=1 // pred_fallthru
      _
    // Predicated region
    $region6: #{gcn_forward.5} parent=1 // pred_check
      _
    $region7: #{gcn_forward.5} parent=1 // pred_check_branch
      %13 = sbr.rel (0) target = $region9
    $region8: #{gcn_forward.5} parent=1 // pred_region
      _
    $region9: #{gcn_forward.5} parent=1 // pred_fallthru
      _
    // Predicated region
    $region10: #{gcn_forward.5} parent=1 // pred_check
      _
    $region11: #{gcn_forward.5} parent=1 // pred_check_branch
      %15 = sbr.rel (0) target = $region13
    $region12: #{gcn_forward.5} parent=1 // pred_region
      _
    $region13: #{gcn_forward.5} parent=1 // pred_fallthru
      _
    // Predicated region
    $region14: #{gcn_forward.5} parent=1 // pred_check
      _
    $region15: #{gcn_forward.5} parent=1 // pred_check_branch
      %17 = sbr.rel (0) target = $region17
    $region16: #{gcn_forward.5} parent=1 // pred_region
      _
    $region17: #{gcn_forward.5} parent=1 // pred_fallthru
      _
    %v18 = vld [vmem:[%s0] sm:$0x1]
    %v19 = vld [vmem:[%s1] sm:$0xf]
    %v20 = vld [vmem:[%s1 + $0x4] sm:$0xf]
    %v21 = vld [vmem:[%s1 + $0x8] sm:$0xf]
    %v22 = vld [vmem:[%s1 + $0xc] sm:$0xf]
    %v23 = vld [vmem:[%s1 + $0x10] sm:$0xf]
    %v24 = vld [vmem:[%s1 + $0x14] sm:$0xf]
    %v25 = vld [vmem:[%s1 + $0x18] sm:$0xf]
    %v26 = vld [vmem:[%s1 + $0x1c] sm:$0xf]
    %v27 = vld [vmem:[%s1 + $0x20] sm:$0xf]
    %v28 = vld [vmem:[%s1 + $0x24] sm:$0xf]
    %v29 = vld [vmem:[%s1 + $0x28] sm:$0xf]
    %v30 = vld [vmem:[%s1 + $0x2c] sm:$0xf]
    %v31 = vld [vmem:[%s1 + $0x30] sm:$0xf]
    %v32 = vld [vmem:[%s1 + $0x34] sm:$0xf]
    %v33 = vld [vmem:[%s1 + $0x38] sm:$0xf]
    %v34 = vld [vmem:[%s1 + $0x3c] sm:$0xf]
    %v51 = vunpack.c.l.b16 %v19
    %v52 = vunpack.c.l.b16 %v20
    %v53 = vunpack.c.l.b16 %v21
    %v54 = vunpack.c.l.b16 %v22
    %v55 = vunpack.c.l.b16 %v23
    %v56 = vunpack.c.l.b16 %v24
    %v57 = vunpack.c.l.b16 %v25
    %v58 = vunpack.c.l.b16 %v26
    %v59 = vunpack.c.l.b16 %v27
    %v60 = vunpack.c.l.b16 %v28
    %v61 = vunpack.c.l.b16 %v29
    %v62 = vunpack.c.l.b16 %v30
    %v63 = vunpack.c.l.b16 %v31
    %v64 = vunpack.c.l.b16 %v32
    %v65 = vunpack.c.l.b16 %v33
    %v66 = vunpack.c.l.b16 %v34
    %v67 = vpack.c.b16 %v52, %v51
    %v68 = vpack.c.b16 %v54, %v53
    %v69 = vpack.c.b16 %v56, %v55
    %v70 = vpack.c.b16 %v58, %v57
    %v71 = vpack.c.b16 %v60, %v59
    %v72 = vpack.c.b16 %v62, %v61
    %v73 = vpack.c.b16 %v64, %v63
    %v74 = vpack.c.b16 %v66, %v65
    %83 = vmatpush.bf16.msra.mxu0 %v74
    %84 = vmatpush.bf16.msra.mxu0 %v73
    %85 = vmatpush.bf16.msra.mxu0 %v72
    %86 = vmatpush.bf16.msra.mxu0 %v71
    %87 = vmatpush.bf16.msra.mxu0 %v70
    %88 = vmatpush.bf16.msra.mxu0 %v69
    %89 = vmatpush.bf16.msra.mxu0 %v68
    %90 = vmatpush.bf16.msra.mxu0 %v67
    %91 = vmatmul.bf16.gmra.mxu0 %v18
    %v92 = vpop.f32.mrf.mxu0
    %v93 = vadd.f32 0.0, %v92
    %v94 = vpop.f32.mrf.mxu0
    %95 = vdwg.mxu0
    %v96 = vld [vmem:[%s2] sm:$0xff]
    %v97 = vld [vmem:[%s2 + $0x8] sm:$0xff]
    %v98 = vld [vmem:[%s2 + $0x10] sm:$0xff]
    %v99 = vld [vmem:[%s2 + $0x18] sm:$0xff]
    %v100 = vld [vmem:[%s2 + $0x20] sm:$0xff]
    %v101 = vld [vmem:[%s2 + $0x28] sm:$0xff]
    %v102 = vld [vmem:[%s2 + $0x30] sm:$0xff]
    %v103 = vld [vmem:[%s2 + $0x38] sm:$0xff]
    %v104 = vld [vmem:[%s2 + $0x40] sm:$0xff]
    %v105 = vld [vmem:[%s2 + $0x48] sm:$0xff]
    %v106 = vld [vmem:[%s2 + $0x50] sm:$0xff]
    %v107 = vld [vmem:[%s2 + $0x58] sm:$0xff]
    %v108 = vld [vmem:[%s2 + $0x60] sm:$0xff]
    %v109 = vld [vmem:[%s2 + $0x68] sm:$0xff]
    %v110 = vld [vmem:[%s2 + $0x70] sm:$0xff]
    %v111 = vld [vmem:[%s2 + $0x78] sm:$0xff]
    %v112 = vld [vmem:[%s3] sm:$0x1]
    %v114 = vperm.slane %v112, 0
    %116 = vmatpush.msra.mxu0 %v111
    %117 = vmatpush.msra.mxu0 %v110
    %118 = vmatpush.msra.mxu0 %v109
    %119 = vmatpush.msra.mxu0 %v108
    %120 = vmatpush.msra.mxu0 %v107
    %121 = vmatpush.msra.mxu0 %v106
    %122 = vmatpush.msra.mxu0 %v105
    %123 = vmatpush.msra.mxu0 %v104
    %124 = vmatpush.msra.mxu0 %v103
    %125 = vmatpush.msra.mxu0 %v102
    %126 = vmatpush.msra.mxu0 %v101
    %127 = vmatpush.msra.mxu0 %v100
    %128 = vmatpush.msra.mxu0 %v99
    %129 = vmatpush.msra.mxu0 %v98
    %130 = vmatpush.msra.mxu0 %v97
    %131 = vmatpush.msra.mxu0 %v96
    %132 = vmatmul.f32.gmra.mxu0 %v93
    %v133 = vpop.f32.mrf.mxu0
    %v134 = vadd.f32 %v114, %v133
    %135 = vdwg.mxu0
    %vm136 = vcmask 25600
    %v137 = vsel %vm136, %v134, -inf
    %138 = vmax.xlane.f32.xlu0 %v137
    %v139 = vpop.xlane.xlu0 %138
    %v140 = vsub.f32 %v134, %v139
    %v141 = vmul.f32 %v140, 1.442695
    %v142 = vpow.pop %v141
    %v143 = vsel %vm136, %v142, 0.0
    %144 = vadd.xlane.f32.xlu0 %v143
    %v145 = vpop.xlane.xlu0 %144
    %v146 = vlog2.pop %v145
    %v147 = vmul.f32 %v146, 0.6931472
    %v148 = vsub.f32 %v140, %v147
    %149 = vst.msk [vmem:[#allocation2] sm:$0x3] %vm136, %v148
    // Predicated region
    $region18: #{gcn_forward.5} parent=1 // pred_check
      _
    $region19: #{gcn_forward.5} parent=1 // pred_check_branch
      %151 = sbr.rel (0) target = $region21
    $region20: #{gcn_forward.5} parent=1 // pred_region
      %153 = vsyncadd [#allocation3], 0
      %s155 = sshll.u32 [#allocation2], 4
      %s156 = int_to_ptr.vmem [resolvable:$true] %s155
      %s157 = sshll.u32 %s4, 4
      %s158 = int_to_ptr.hbm [resolvable:$true] %s157
      %160 = dma.vmem_to_hbm [thread:$0]  %s156, 32, %s158, [#allocation3]
    $region21: #{gcn_forward.5} parent=1 // pred_fallthru
      _
    // Predicated region
    $region22: #{gcn_forward.5} parent=1 // pred_check
      _
    $region23: #{gcn_forward.5} parent=1 // pred_check_branch
      %162 = sbr.rel (0) target = $region25
    $region24: #{gcn_forward.5} parent=1 // pred_region
      %164 = dma.done [#allocation3], 32
    $region25: #{gcn_forward.5} parent=1 // pred_fallthru
      _
    %165 = vsyncpa [#allocation3], 1

// kernel: gcn_forward.4
$region0: #{gcn_forward.4}
  #allocation0 [shape = 'u32[]', space=smem, size = 0x4, offset = 0x4, fixed_abs, tag = 'smem constant byte address 0x4 - core index']
  #allocation1 [shape = 'u32[72,128]{1,0:T(1,128)}', space=vmem, size = 0x9000, scoped, tag = 'internal scratch']
  #allocation2 [shape = 'f32[64,128]{1,0:T(8,128)}', space=vmem, size = 0x8000, scoped, tag = 'scratch operand']
  %s0 = inlined_call_operand.vmem [shape: s8[128,128], index: 0, kind: input, shape index: {}]
  %s1 = inlined_call_operand.vmem [shape: bf16[128,128], index: 1, kind: input, shape index: {}]
  %s2 = inlined_call_operand.vmem [shape: f32[128,1], index: 2, kind: input, shape index: {}]
  %s3 = inlined_call_operand.vmem [shape: f32[1,128], index: 3, kind: input, shape index: {}]
  %s4 = inlined_call_operand.vmem [shape: f32[1,128], index: 4, kind: input, shape index: {}]
  %s5 = inlined_call_operand.vmem [shape: bf16[128,128], index: 5, kind: output, shape index: {}]
  %s6 = sld [smem:[#allocation0]]
  $region61: #{gcn_forward.4} parent=0
    _
  %s8 = ssub.s32 1, %s6
  %s9 = scalar_select 0, %s8, %s6
  loop: start=0, step=1, limit=4
  $region2: #{gcn_forward.4} parent=0 // loop_pre_header
    _
  $region3: #{gcn_forward.4} parent=0 // loop_header
    %s11 = sphi 0, %s15
    %p12 = scmp.ge.s32.totalorder %s11, 4
    %s18 = sphi 0, %s30
    %s19 = sphi 0, %s26
    %s20 = sphi 0, %s18
    %s21 = sphi 0, %s19
    %s22 = sphi 0, %s20
    %s23 = sphi 0, %s21
    %s35 = sphi 0, %s37
    %s38 = sphi 0, %s35
    %s39 = sphi 0, %s38
    %s55 = sphi 0, %s39
    %s59 = sphi 0, %s59
    %s61 = sphi 0, %s59
    %s62 = sphi 0, %s61
    %s76 = sphi 0, %s62
    %s82 = sphi 0, %s84
    %s85 = sphi 0, %s82
    %s86 = sphi 0, %s85
    %s102 = sphi 0, %s86
    %s106 = sphi 0, %s106
    %s108 = sphi 0, %s106
    %s109 = sphi 0, %s108
    %s123 = sphi 0, %s109
    %s127 = sphi 0, %s127
    %s129 = sphi 0, %s127
    %s130 = sphi 0, %s129
    %s144 = sphi 0, %s130
    %s150 = sphi 0, %s152
    %s153 = sphi 0, %s150
    %s154 = sphi 0, %s153
    %s170 = sphi 0, %s154
  $region4: #{gcn_forward.4} parent=0 // loop_header_branch
    %14 = sbr.rel (%p12) target = $region8
  $region5: #{gcn_forward.4} parent=0 // loop_body
    %s16 = ssub.s32 %s11, 1
    %s17 = ssub.s32 %s11, 2
    %s24 = sadd.s32 1, %s19
    %p25 = scmp.ge.s32.totalorder %s24, 1
    %s26 = scalar_select %p25, 0, %s24
    %s27 = sadd.s32 1, %s18
    %s28 = scalar_select %p25, %s27, %s18
    %p29 = scmp.ge.s32.totalorder %s28, 2
    %s30 = scalar_select %p29, 0, %s28
    %s31 = ssub.s32 %s18, %s30
    %s32 = ssub.s32 %s19, %s26
    %s33 = sor.u32 %s31, %s32
    %p34 = scmp.eq.s32.totalorder %s33, 0
    %s36 = sadd.s32 %s35, 1
    %s37 = scalar_select %p34, %s35, %s36
    %p40 = pneg %p34
    %p41 = scmp.eq.s32.totalorder %s11, 1
    %p42 = por %p40, %p41
    %p43 = scmp.ne.s32.totalorder %s35, %s38
    %p44 = scmp.eq.s32.totalorder %s11, 0
    %p45 = por %p43, %p44
    %p46 = scmp.ne.s32.totalorder %s35, %s38
    %p47 = scmp.eq.s32.totalorder %s16, 1
    %p48 = por %p46, %p47
    %p49 = scmp.ne.s32.totalorder %s38, %s39
    %p50 = scmp.eq.s32.totalorder %s16, 0
    %p51 = por %p49, %p50
    %p52 = scmp.ne.s32.totalorder %s38, %s39
    %p53 = scmp.eq.s32.totalorder %s17, 1
    %p54 = por %p52, %p53
    %p56 = scmp.ne.s32.totalorder %s39, %s55
    %p57 = scmp.eq.s32.totalorder %s17, 0
    %p58 = por %p56, %p57
    %s60 = sadd.s32 %s59, 1
    %p63 = scmp.eq.s32.totalorder %s11, 1
    %p64 = scmp.ne.s32.totalorder %s59, %s61
    %p65 = scmp.eq.s32.totalorder %s11, 0
    %p66 = por %p64, %p65
    %p67 = scmp.ne.s32.totalorder %s59, %s61
    %p68 = scmp.eq.s32.totalorder %s16, 1
    %p69 = por %p67, %p68
    %p70 = scmp.ne.s32.totalorder %s61, %s62
    %p71 = scmp.eq.s32.totalorder %s16, 0
    %p72 = por %p70, %p71
    %p73 = scmp.ne.s32.totalorder %s61, %s62
    %p74 = scmp.eq.s32.totalorder %s17, 1
    %p75 = por %p73, %p74
    %p77 = scmp.ne.s32.totalorder %s62, %s76
    %p78 = scmp.eq.s32.totalorder %s17, 0
    %p79 = por %p77, %p78
    %s80 = ssub.s32 %s18, %s30
    %p81 = scmp.eq.s32.totalorder %s80, 0
    %s83 = sadd.s32 %s82, 1
    %s84 = scalar_select %p81, %s82, %s83
    %p87 = pneg %p81
    %p88 = scmp.eq.s32.totalorder %s11, 1
    %p89 = por %p87, %p88
    %p90 = scmp.ne.s32.totalorder %s82, %s85
    %p91 = scmp.eq.s32.totalorder %s11, 0
    %p92 = por %p90, %p91
    %p93 = scmp.ne.s32.totalorder %s82, %s85
    %p94 = scmp.eq.s32.totalorder %s16, 1
    %p95 = por %p93, %p94
    %p96 = scmp.ne.s32.totalorder %s85, %s86
    %p97 = scmp.eq.s32.totalorder %s16, 0
    %p98 = por %p96, %p97
    %p99 = scmp.ne.s32.totalorder %s85, %s86
    %p100 = scmp.eq.s32.totalorder %s17, 1
    %p101 = por %p99, %p100
    %p103 = scmp.ne.s32.totalorder %s86, %s102
    %p104 = scmp.eq.s32.totalorder %s17, 0
    %p105 = por %p103, %p104
    %s107 = sadd.s32 %s106, 1
    %p110 = scmp.eq.s32.totalorder %s11, 1
    %p111 = scmp.ne.s32.totalorder %s106, %s108
    %p112 = scmp.eq.s32.totalorder %s11, 0
    %p113 = por %p111, %p112
    %p114 = scmp.ne.s32.totalorder %s106, %s108
    %p115 = scmp.eq.s32.totalorder %s16, 1
    %p116 = por %p114, %p115
    %p117 = scmp.ne.s32.totalorder %s108, %s109
    %p118 = scmp.eq.s32.totalorder %s16, 0
    %p119 = por %p117, %p118
    %p120 = scmp.ne.s32.totalorder %s108, %s109
    %p121 = scmp.eq.s32.totalorder %s17, 1
    %p122 = por %p120, %p121
    %p124 = scmp.ne.s32.totalorder %s109, %s123
    %p125 = scmp.eq.s32.totalorder %s17, 0
    %p126 = por %p124, %p125
    %s128 = sadd.s32 %s127, 1
    %p131 = scmp.eq.s32.totalorder %s11, 1
    %p132 = scmp.ne.s32.totalorder %s127, %s129
    %p133 = scmp.eq.s32.totalorder %s11, 0
    %p134 = por %p132, %p133
    %p135 = scmp.ne.s32.totalorder %s127, %s129
    %p136 = scmp.eq.s32.totalorder %s16, 1
    %p137 = por %p135, %p136
    %p138 = scmp.ne.s32.totalorder %s129, %s130
    %p139 = scmp.eq.s32.totalorder %s16, 0
    %p140 = por %p138, %p139
    %p141 = scmp.ne.s32.totalorder %s129, %s130
    %p142 = scmp.eq.s32.totalorder %s17, 1
    %p143 = por %p141, %p142
    %p145 = scmp.ne.s32.totalorder %s130, %s144
    %p146 = scmp.eq.s32.totalorder %s17, 0
    %p147 = por %p145, %p146
    %s148 = ssub.s32 %s18, %s30
    %p149 = scmp.eq.s32.totalorder %s148, 0
    %s151 = sadd.s32 %s150, 1
    %s152 = scalar_select %p149, %s150, %s151
    %p155 = pneg %p149
    %p156 = scmp.eq.s32.totalorder %s11, 1
    %p157 = por %p155, %p156
    %p158 = scmp.ne.s32.totalorder %s150, %s153
    %p159 = scmp.eq.s32.totalorder %s11, 0
    %p160 = por %p158, %p159
    %p161 = scmp.ne.s32.totalorder %s150, %s153
    %p162 = scmp.eq.s32.totalorder %s16, 1
    %p163 = por %p161, %p162
    %p164 = scmp.ne.s32.totalorder %s153, %s154
    %p165 = scmp.eq.s32.totalorder %s16, 0
    %p166 = por %p164, %p165
    %p167 = scmp.ne.s32.totalorder %s153, %s154
    %p168 = scmp.eq.s32.totalorder %s17, 1
    %p169 = por %p167, %p168
    %p171 = scmp.ne.s32.totalorder %s154, %s170
    %p172 = scmp.eq.s32.totalorder %s17, 0
    %p173 = por %p171, %p172
    %p174 = scmp.le.s32.totalorder 1, %s11
    %p175 = scmp.lt.s32.totalorder %s11, 3
    %p176 = pnand %p174, %p175
    %p177 = pneg %p176
    // Predicated region
    $region9: #{gcn_forward.4} parent=5 // pred_check
      _
    $region10: #{gcn_forward.4} parent=5 // pred_check_branch
      %179 = sbr.rel (%p176) target = $region12
    $region11: #{gcn_forward.4} parent=5 // pred_region
      %s180 = ssub.s32 %s11, 1
      // Predicated region
      $region13: #{gcn_forward.4} parent=11 // pred_check
        %p181 = pneg %p72
      $region14: #{gcn_forward.4} parent=11 // pred_check_branch
        %183 = sbr.rel (%p181) target = $region16
      $region15: #{gcn_forward.4} parent=11 // pred_region
        _
      $region16: #{gcn_forward.4} parent=11 // pred_fallthru
        _
      // Predicated region
      $region17: #{gcn_forward.4} parent=11 // pred_check
        %p184 = pneg %p119
      $region18: #{gcn_forward.4} parent=11 // pred_check_branch
        %186 = sbr.rel (%p184) target = $region20
      $region19: #{gcn_forward.4} parent=11 // pred_region
        _
      $region20: #{gcn_forward.4} parent=11 // pred_fallthru
        _
      // Predicated region
      $region21: #{gcn_forward.4} parent=11 // pred_check
        %p187 = pneg %p140
      $region22: #{gcn_forward.4} parent=11 // pred_check_branch
        %189 = sbr.rel (%p187) target = $region24
      $region23: #{gcn_forward.4} parent=11 // pred_region
        _
      $region24: #{gcn_forward.4} parent=11 // pred_fallthru
        _
    $region12: #{gcn_forward.4} parent=5 // pred_fallthru
      _
    %p190 = scmp.lt.s32.totalorder %s11, 2
    // Predicated region
    $region25: #{gcn_forward.4} parent=5 // pred_check
      %p191 = pneg %p190
    $region26: #{gcn_forward.4} parent=5 // pred_check_branch
      %193 = sbr.rel (%p191) target = $region28
    $region27: #{gcn_forward.4} parent=5 // pred_region
      // Predicated region
      $region29: #{gcn_forward.4} parent=27 // pred_check
        %p194 = pneg %p45
      $region30: #{gcn_forward.4} parent=27 // pred_check_branch
        %196 = sbr.rel (%p194) target = $region32
      $region31: #{gcn_forward.4} parent=27 // pred_region
        %s197 = smul.u32 8, %s18
        %p198 = scmp.lt.s32.totalorder %s197, 15
        %s199 = scalar_select %p198, %s197, 15
        %p200 = scmp.lt.s32.totalorder %s19, 0
        %s201 = scalar_select %p200, %s19, 0
        %s202 = sadd.s32 %s201, %s199
        %s203 = smul.addr %s202, 2
        %s204 = scalar_lea.vmem %s0, %s203
        %s205 = smul.u32 8, %s18
      $region32: #{gcn_forward.4} parent=27 // pred_fallthru
        _
      // Predicated region
      $region33: #{gcn_forward.4} parent=27 // pred_check
        %p206 = pneg %p92
      $region34: #{gcn_forward.4} parent=27 // pred_check_branch
        %208 = sbr.rel (%p206) target = $region36
      $region35: #{gcn_forward.4} parent=27 // pred_region
        %s209 = smul.u32 8, %s18
        %p210 = scmp.lt.s32.totalorder %s209, 15
        %s211 = scalar_select %p210, %s209, 15
        %s212 = smul.addr %s211, 8
        %s213 = scalar_lea.vmem %s2, %s212
        %s214 = smul.u32 8, %s18
      $region36: #{gcn_forward.4} parent=27 // pred_fallthru
        _
    $region28: #{gcn_forward.4} parent=5 // pred_fallthru
      _
    %p215 = scmp.le.s32.totalorder 1, %s11
    %p216 = scmp.lt.s32.totalorder %s11, 3
    %p217 = pnand %p215, %p216
    %p218 = pneg %p217
    // Predicated region
    $region37: #{gcn_forward.4} parent=5 // pred_check
      _
    $region38: #{gcn_forward.4} parent=5 // pred_check_branch
      %220 = sbr.rel (%p217) target = $region40
    $region39: #{gcn_forward.4} parent=5 // pred_region
      %s221 = ssub.s32 %s11, 1
      %s222 = smul.u32 8, %s20
      %p223 = scmp.lt.s32.totalorder %s222, 15
      %s224 = scalar_select %p223, %s222, 15
      %p225 = scmp.lt.s32.totalorder %s21, 0
      %s226 = scalar_select %p225, %s21, 0
      %s227 = sadd.s32 %s226, %s224
      %s228 = smul.addr %s227, 2
      %s229 = scalar_lea.vmem %s0, %s228
      %p230 = pneg %p51
      %p231 = pneg %p48
      %p232 = pneg %p72
      %p233 = pneg %p69
      %s234 = smul.u32 8, %s20
      %p235 = scmp.lt.s32.totalorder %s234, 15
      %s236 = scalar_select %p235, %s234, 15
      %s237 = smul.addr %s236, 8
      %s238 = scalar_lea.vmem %s2, %s237
      %p239 = pneg %p98
      %p240 = pneg %p95
      %p241 = pneg %p119
      %p242 = pneg %p116
      %p243 = pneg %p140
      %p244 = pneg %p137
      %p245 = pneg %p166
      %p246 = pneg %p163
      %s247 = smul.u32 8, %s20
      %p248 = scmp.lt.s32.totalorder %s247, 15
      %s249 = scalar_select %p248, %s247, 15
      %s250 = smul.addr %s249, 4
      %s251 = scalar_lea.vmem %s5, %s250
      %s252 = smul.u32 8, %s20
      %p253 = scmp.lt.s32.totalorder %s252, 15
      %s254 = scalar_select %p253, %s252, 15
      %p255 = scmp.lt.s32.totalorder %s21, 0
      %s256 = scalar_select %p255, %s21, 0
      %s257 = sadd.s32 %s256, %s254
      %s258 = smul.addr %s257, 2
      %s259 = scalar_lea.vmem %s0, %s258
      %s260 = smul.u32 8, %s20
      %s261 = smul.u32 8, %s20
      %p262 = scmp.lt.s32.totalorder %s261, 15
      %s263 = scalar_select %p262, %s261, 15
      %s264 = smul.addr %s263, 8
      %s265 = scalar_lea.vmem %s2, %s264
      %s266 = smul.u32 8, %s20
      %s267 = smul.u32 8, %s20
      %p268 = scmp.lt.s32.totalorder %s267, 15
      %s269 = scalar_select %p268, %s267, 15
      %s270 = smul.addr %s269, 4
      %s271 = scalar_lea.vmem %s5, %s270
      %s272 = smul.u32 8, %s20
      %p273 = scmp.eq.s32.totalorder %s21, 0
      // Predicated region
      $region41: #{gcn_forward.4} parent=39 // pred_check
        %p274 = pneg %p273
      $region42: #{gcn_forward.4} parent=39 // pred_check_branch
        %276 = sbr.rel (%p274) target = $region44
      $region43: #{gcn_forward.4} parent=39 // pred_region
        %277 = vst [vmem:[#allocation2] sm:$0xff] 0.0
        %278 = vst [vmem:[#allocation2 + $0x8] sm:$0xff] 0.0
        %279 = vst [vmem:[#allocation2 + $0x10] sm:$0xff] 0.0
        %280 = vst [vmem:[#allocation2 + $0x18] sm:$0xff] 0.0
        %281 = vst [vmem:[#allocation2 + $0x20] sm:$0xff] 0.0
        %282 = vst [vmem:[#allocation2 + $0x28] sm:$0xff] 0.0
        %283 = vst [vmem:[#allocation2 + $0x30] sm:$0xff] 0.0
        %284 = vst [vmem:[#allocation2 + $0x38] sm:$0xff] 0.0
      $region44: #{gcn_forward.4} parent=39 // pred_fallthru
        _
      %v285 = vld [vmem:[%s259] sm:$0x3]
      %v286 = vld [vmem:[%s259 + $0x2] sm:$0x3]
      %v287 = vld [vmem:[%s259 + $0x4] sm:$0x3]
      %v288 = vld [vmem:[%s259 + $0x6] sm:$0x3]
      %v289 = vld [vmem:[%s259 + $0x8] sm:$0x3]
      %v290 = vld [vmem:[%s259 + $0xa] sm:$0x3]
      %v291 = vld [vmem:[%s259 + $0xc] sm:$0x3]
      %v292 = vld [vmem:[%s259 + $0xe] sm:$0x3]
      %v293 = vunpack.c.0.s8 %v285
      %v294 = vunpack.c.0.s8 %v286
      %v295 = vunpack.c.0.s8 %v287
      %v296 = vunpack.c.0.s8 %v288
      %v297 = vunpack.c.0.s8 %v289
      %v298 = vunpack.c.0.s8 %v290
      %v299 = vunpack.c.0.s8 %v291
      %v300 = vunpack.c.0.s8 %v292
      %v301 = vcvt.s32.f32 %v293
      %v302 = vcvt.s32.f32 %v294
      %v303 = vcvt.s32.f32 %v295
      %v304 = vcvt.s32.f32 %v296
      %v305 = vcvt.s32.f32 %v297
      %v306 = vcvt.s32.f32 %v298
      %v307 = vcvt.s32.f32 %v299
      %v308 = vcvt.s32.f32 %v300
      %v309 = vpack.c.bf16 %v302, %v301
      %v310 = vpack.c.bf16 %v304, %v303
      %v311 = vpack.c.bf16 %v306, %v305
      %v312 = vpack.c.bf16 %v308, %v307
      %s313 = smul.u32 %s21, 128
      %v314 = vld [vmem:[#allocation2] sm:$0xff]
      %v315 = vld [vmem:[#allocation2 + $0x8] sm:$0xff]
      %v316 = vld [vmem:[#allocation2 + $0x10] sm:$0xff]
      %v317 = vld [vmem:[#allocation2 + $0x18] sm:$0xff]
      %v318 = vld [vmem:[#allocation2 + $0x20] sm:$0xff]
      %v319 = vld [vmem:[#allocation2 + $0x28] sm:$0xff]
      %v320 = vld [vmem:[#allocation2 + $0x30] sm:$0xff]
      %v321 = vld [vmem:[#allocation2 + $0x38] sm:$0xff]
      %s322 = sshra.s32 %s313, 3
      %s323 = sand.u32 %s313, 7
      %s324 = smul.addr %s322, 4
      %s325 = scalar_lea.vmem %s1, %s324
      %v326 = vld [vmem:[%s325] sm:$0xf]
      %v327 = vld [vmem:[%s325 + $0x4] sm:$0xf]
      %v328 = vld [vmem:[%s325 + $0x8] sm:$0xf]
      %v329 = vld [vmem:[%s325 + $0xc] sm:$0xf]
      %v330 = vld [vmem:[%s325 + $0x10] sm:$0xf]
      %v331 = vld [vmem:[%s325 + $0x14] sm:$0xf]
      %v332 = vld [vmem:[%s325 + $0x18] sm:$0xf]
      %v333 = vld [vmem:[%s325 + $0x1c] sm:$0xf]
      %v334 = vld [vmem:[%s325 + $0x20] sm:$0xf]
      %v335 = vld [vmem:[%s325 + $0x24] sm:$0xf]
      %v336 = vld [vmem:[%s325 + $0x28] sm:$0xf]
      %v337 = vld [vmem:[%s325 + $0x2c] sm:$0xf]
      %v338 = vld [vmem:[%s325 + $0x30] sm:$0xf]
      %v339 = vld [vmem:[%s325 + $0x34] sm:$0xf]
      %v340 = vld [vmem:[%s325 + $0x38] sm:$0xf]
      %v341 = vld [vmem:[%s325 + $0x3c] sm:$0xf]
      %v358 = vunpack.c.l.b16 %v326
      %v359 = vunpack.c.l.b16 %v327
      %v360 = vunpack.c.l.b16 %v328
      %v361 = vunpack.c.l.b16 %v329
      %v362 = vunpack.c.l.b16 %v330
      %v363 = vunpack.c.l.b16 %v331
      %v364 = vunpack.c.l.b16 %v332
      %v365 = vunpack.c.l.b16 %v333
      %v366 = vunpack.c.l.b16 %v334
      %v367 = vunpack.c.l.b16 %v335
      %v368 = vunpack.c.l.b16 %v336
      %v369 = vunpack.c.l.b16 %v337
      %v370 = vunpack.c.l.b16 %v338
      %v371 = vunpack.c.l.b16 %v339
      %v372 = vunpack.c.l.b16 %v340
      %v373 = vunpack.c.l.b16 %v341
      %v374 = vpack.c.b16 %v359, %v358
      %v375 = vpack.c.b16 %v361, %v360
      %v376 = vpack.c.b16 %v363, %v362
      %v377 = vpack.c.b16 %v365, %v364
      %v378 = vpack.c.b16 %v367, %v366
      %v379 = vpack.c.b16 %v369, %v368
      %v380 = vpack.c.b16 %v371, %v370
      %v381 = vpack.c.b16 %v373, %v372
      %390 = vmatpush.bf16.msra.mxu0 %v381
      %391 = vmatpush.bf16.msra.mxu0 %v380
      %392 = vmatpush.bf16.msra.mxu0 %v379
      %393 = vmatpush.bf16.msra.mxu0 %v378
      %394 = vmatpush.bf16.msra.mxu0 %v377
      %395 = vmatpush.bf16.msra.mxu0 %v376
      %396 = vmatpush.bf16.msra.mxu0 %v375
      %397 = vmatpush.bf16.msra.mxu0 %v374
      %398 = vmatmul.bf16.gmra.mxu0 %v309
      %v399 = vpop.f32.mrf.mxu0
      %v400 = vadd.f32 0.0, %v399
      %v401 = vpop.f32.mrf.mxu0
      %v402 = vadd.f32 0.0, %v401
      %403 = vmatmul.bf16.gmra.mxu0 %v310
      %v404 = vpop.f32.mrf.mxu0
      %v405 = vadd.f32 0.0, %v404
      %v406 = vpop.f32.mrf.mxu0
      %v407 = vadd.f32 0.0, %v406
      %408 = vmatmul.bf16.gmra.mxu0 %v311
      %v409 = vpop.f32.mrf.mxu0
      %v410 = vadd.f32 0.0, %v409
      %v411 = vpop.f32.mrf.mxu0
      %v412 = vadd.f32 0.0, %v411
      %413 = vmatmul.bf16.gmra.mxu0 %v312
      %v414 = vpop.f32.mrf.mxu0
      %v415 = vadd.f32 0.0, %v414
      %v416 = vpop.f32.mrf.mxu0
      %v417 = vadd.f32 0.0, %v416
      %418 = vdwg.mxu0
      %v419 = vadd.f32 %v314, %v400
      %v420 = vadd.f32 %v315, %v402
      %v421 = vadd.f32 %v316, %v405
      %v422 = vadd.f32 %v317, %v407
      %v423 = vadd.f32 %v318, %v410
      %v424 = vadd.f32 %v319, %v412
      %v425 = vadd.f32 %v320, %v415
      %v426 = vadd.f32 %v321, %v417
      %427 = vst [vmem:[#allocation2] sm:$0xff] %v419
      %428 = vst [vmem:[#allocation2 + $0x8] sm:$0xff] %v420
      %429 = vst [vmem:[#allocation2 + $0x10] sm:$0xff] %v421
      %430 = vst [vmem:[#allocation2 + $0x18] sm:$0xff] %v422
      %431 = vst [vmem:[#allocation2 + $0x20] sm:$0xff] %v423
      %432 = vst [vmem:[#allocation2 + $0x28] sm:$0xff] %v424
      %433 = vst [vmem:[#allocation2 + $0x30] sm:$0xff] %v425
      %434 = vst [vmem:[#allocation2 + $0x38] sm:$0xff] %v426
      // Predicated region
      $region45: #{gcn_forward.4} parent=39 // pred_check
        %p435 = pneg %p273
      $region46: #{gcn_forward.4} parent=39 // pred_check_branch
        %437 = sbr.rel (%p435) target = $region48
      $region47: #{gcn_forward.4} parent=39 // pred_region
        %v438 = vld [vmem:[%s265] sm:$0xff]
        %v439 = vld [vmem:[%s265 + $0x8] sm:$0xff]
        %v440 = vld [vmem:[%s265 + $0x10] sm:$0xff]
        %v441 = vld [vmem:[%s265 + $0x18] sm:$0xff]
        %v442 = vld [vmem:[%s265 + $0x20] sm:$0xff]
        %v443 = vld [vmem:[%s265 + $0x28] sm:$0xff]
        %v444 = vld [vmem:[%s265 + $0x30] sm:$0xff]
        %v445 = vld [vmem:[%s265 + $0x38] sm:$0xff]
        %v446 = vld [vmem:[#allocation2] sm:$0xff]
        %v447 = vld [vmem:[#allocation2 + $0x8] sm:$0xff]
        %v448 = vld [vmem:[#allocation2 + $0x10] sm:$0xff]
        %v449 = vld [vmem:[#allocation2 + $0x18] sm:$0xff]
        %v450 = vld [vmem:[#allocation2 + $0x20] sm:$0xff]
        %v451 = vld [vmem:[#allocation2 + $0x28] sm:$0xff]
        %v452 = vld [vmem:[#allocation2 + $0x30] sm:$0xff]
        %v453 = vld [vmem:[#allocation2 + $0x38] sm:$0xff]
        %455 = vset.pattern.permute.xlu0 0
        %456 = vperm.xlu0 %455, %v438
        %v457 = vpop.permute.xlu0 %456
        %460 = vset.pattern.permute.xlu0 0
        %461 = vperm.xlu0 %460, %v439
        %v462 = vpop.permute.xlu0 %461
        %465 = vset.pattern.permute.xlu0 0
        %466 = vperm.xlu0 %465, %v440
        %v467 = vpop.permute.xlu0 %466
        %470 = vset.pattern.permute.xlu0 0
        %471 = vperm.xlu0 %470, %v441
        %v472 = vpop.permute.xlu0 %471
        %475 = vset.pattern.permute.xlu0 0
        %476 = vperm.xlu0 %475, %v442
        %v477 = vpop.permute.xlu0 %476
        %480 = vset.pattern.permute.xlu0 0
        %481 = vperm.xlu0 %480, %v443
        %v482 = vpop.permute.xlu0 %481
        %485 = vset.pattern.permute.xlu0 0
        %486 = vperm.xlu0 %485, %v444
        %v487 = vpop.permute.xlu0 %486
        %490 = vset.pattern.permute.xlu0 0
        %491 = vperm.xlu0 %490, %v445
        %v492 = vpop.permute.xlu0 %491
        %v494 = vmul.f32 %v446, %v457
        %v495 = vmul.f32 %v447, %v462
        %v496 = vmul.f32 %v448, %v467
        %v497 = vmul.f32 %v449, %v472
        %v498 = vmul.f32 %v450, %v477
        %v499 = vmul.f32 %v451, %v482
        %v500 = vmul.f32 %v452, %v487
        %v501 = vmul.f32 %v453, %v492
        %v502 = vld [vmem:[%s3] sm:$0x1]
        %v504 = vperm.slane %v502, 0
        %v506 = vmul.f32 %v494, %v504
        %v507 = vmul.f32 %v495, %v504
        %v508 = vmul.f32 %v496, %v504
        %v509 = vmul.f32 %v497, %v504
        %v510 = vmul.f32 %v498, %v504
        %v511 = vmul.f32 %v499, %v504
        %v512 = vmul.f32 %v500, %v504
        %v513 = vmul.f32 %v501, %v504
        %v514 = vld [vmem:[%s4] sm:$0x1]
        %v516 = vperm.slane %v514, 0
        %v518 = vadd.f32 %v506, %v516
        %v519 = vadd.f32 %v507, %v516
        %v520 = vadd.f32 %v508, %v516
        %v521 = vadd.f32 %v509, %v516
        %v522 = vadd.f32 %v510, %v516
        %v523 = vadd.f32 %v511, %v516
        %v524 = vadd.f32 %v512, %v516
        %v525 = vadd.f32 %v513, %v516
        %v526 = vmax.f32 %v518, 0.0
        %v527 = vmax.f32 %v519, 0.0
        %v528 = vmax.f32 %v520, 0.0
        %v529 = vmax.f32 %v521, 0.0
        %v530 = vmax.f32 %v522, 0.0
        %v531 = vmax.f32 %v523, 0.0
        %v532 = vmax.f32 %v524, 0.0
        %v533 = vmax.f32 %v525, 0.0
        %v534 = vpack.c.bf16 %v526, %v526
        %v535 = vpack.c.bf16 %v527, %v527
        %v536 = vpack.c.bf16 %v528, %v528
        %v537 = vpack.c.bf16 %v529, %v529
        %v538 = vpack.c.bf16 %v530, %v530
        %v539 = vpack.c.bf16 %v531, %v531
        %v540 = vpack.c.bf16 %v532, %v532
        %v541 = vpack.c.bf16 %v533, %v533
        %542 = vst [vmem:[%s271] sm:$0xf] %v534
        %543 = vst [vmem:[%s271 + $0x4] sm:$0xf] %v535
        %544 = vst [vmem:[%s271 + $0x8] sm:$0xf] %v536
        %545 = vst [vmem:[%s271 + $0xc] sm:$0xf] %v537
        %546 = vst [vmem:[%s271 + $0x10] sm:$0xf] %v538
        %547 = vst [vmem:[%s271 + $0x14] sm:$0xf] %v539
        %548 = vst [vmem:[%s271 + $0x18] sm:$0xf] %v540
        %549 = vst [vmem:[%s271 + $0x1c] sm:$0xf] %v541
      $region48: #{gcn_forward.4} parent=39 // pred_fallthru
        _
      %s550 = smul.u32 8, %s20
      %p551 = scmp.lt.s32.totalorder %s550, 15
      %s552 = scalar_select %p551, %s550, 15
      %s553 = smul.addr %s552, 4
      %s554 = scalar_lea.vmem %s5, %s553
      // Predicated region
      $region49: #{gcn_forward.4} parent=39 // pred_check
        %p555 = pneg %p163
      $region50: #{gcn_forward.4} parent=39 // pred_check_branch
        %557 = sbr.rel (%p555) target = $region52
      $region51: #{gcn_forward.4} parent=39 // pred_region
        %s558 = smul.u32 8, %s20
      $region52: #{gcn_forward.4} parent=39 // pred_fallthru
        _
    $region40: #{gcn_forward.4} parent=5 // pred_fallthru
      _
    %p559 = scmp.le.s32.totalorder 2, %s11
    // Predicated region
    $region53: #{gcn_forward.4} parent=5 // pred_check
      %p560 = pneg %p559
    $region54: #{gcn_forward.4} parent=5 // pred_check_branch
      %562 = sbr.rel (%p560) target = $region56
    $region55: #{gcn_forward.4} parent=5 // pred_region
      %s563 = ssub.s32 %s11, 2
      // Predicated region
      $region57: #{gcn_forward.4} parent=55 // pred_check
        %p564 = pneg %p169
      $region58: #{gcn_forward.4} parent=55 // pred_check_branch
        %566 = sbr.rel (%p564) target = $region60
      $region59: #{gcn_forward.4} parent=55 // pred_region
        %s567 = smul.u32 8, %s22
        %p568 = scmp.lt.s32.totalorder %s567, 15
        %s569 = scalar_select %p568, %s567, 15
        %s570 = smul.addr %s569, 4
        %s571 = scalar_lea.vmem %s5, %s570
      $region60: #{gcn_forward.4} parent=55 // pred_fallthru
        _
    $region56: #{gcn_forward.4} parent=5 // pred_fallthru
      _
  $region6: #{gcn_forward.4} parent=0 // loop_footer
    %s15 = sadd.s32 1, %s11
  $region7: #{gcn_forward.4} parent=0 // loop_footer_branch
    %10 = sbr.rel target = $region3
  $region8: #{gcn_forward.4} parent=0 // loop_exit
    _

</llo_original>
